<compile_context>
chip_gen: v6e
topology: v6e:2x2x1
jax: 0.10.0
libtpu: 0.0.40
codegen_flags: <defaults>
</compile_context>

<pallas_src>
import jax
import jax.numpy as jnp
from jax.experimental import pallas as pl
from jax.experimental.pallas import tpu as pltpu


# ----------------------------------------------------------------------------- kernels

def _fc12_kernel(x_ref, w1_ref, b1_ref, w2_ref, b2_ref, h2_ref):
    # fc1 + relu, fc2 + relu in f32 (tiny FLOPs); h2 emitted in bf16 for the
    # fc6 MXU stream.
    h1 = jnp.dot(x_ref[...], w1_ref[...], preferred_element_type=jnp.float32)
    h1 = jnp.maximum(h1 + b1_ref[...], 0.0)
    h2 = jnp.dot(h1, w2_ref[...], preferred_element_type=jnp.float32)
    h2 = jnp.maximum(h2 + b2_ref[...], 0.0)
    h2_ref[...] = h2.astype(h2_ref.dtype)


def _fc6_kernel(h2_ref, b6_ref, w6_ref, out_ref):
    # Per-step work: (B,1024) @ (1024,TN) against the resident h2, plus the
    # bias row for this column tile, picked from the resident b6 tile table.
    j = pl.program_id(0)
    y = jnp.dot(h2_ref[...], w6_ref[...], preferred_element_type=jnp.float32)
    out_ref[...] = (y + b6_ref[pl.ds(j, 1), :]).astype(out_ref.dtype)


# ----------------------------------------------------------------------------- tiling / vmem helpers

_STEP_OVERHEAD_S = 0.35e-6   # measured per-grid-step pipeline overhead
_APPROX_HBM_BW = 1.3e12      # B/s; only used to *rank* candidate tile widths


def _pick_tile_n(out_dim, max_tn=4096):
    """Lane-dense fc6 column tile: minimize (padded w6 DMA time + step overhead)."""
    hi = min(max_tn, max(pl.cdiv(out_dim, 128) * 128, 128))
    best_tn, best_cost = 128, None
    for tn in range(128, hi + 1, 128):
        steps = pl.cdiv(out_dim, tn)
        padded = steps * tn
        cost = (padded * 1024 * 2) / _APPROX_HBM_BW + steps * _STEP_OVERHEAD_S
        if best_cost is None or cost <= best_cost:
            best_tn, best_cost = tn, cost
    return best_tn


def _vmem_capacity_bytes():
    try:
        info = pltpu.get_tpu_info()
        for name in ("vmem_capacity_bytes", "vmem_size_bytes", "vmem_bytes"):
            cap = getattr(info, name, None)
            if cap:
                return int(cap)
    except Exception:
        pass
    return 64 << 20  # conservative: v7x per-TensorCore VMEM


def _vmem_limit_bytes(batch, tn, out_dim_pad):
    resident = batch * 1024 * 2 + out_dim_pad * 4          # h2 (bf16) + b6 (f32)
    per_step = 1024 * tn * 2 + batch * tn * 4              # w6 tile (bf16) + out tile (f32)
    want = 2 * (resident + per_step) + (8 << 20)           # double-buffered + headroom
    cap = _vmem_capacity_bytes() - (8 << 20)               # leave room for Mosaic scratch
    return int(max(min(want, cap), 16 << 20))


# ----------------------------------------------------------------------------- param prep (one-time)

def prepare_decoder_params(params, num_points, num_dims=3, max_tn=4096):
    """One-time prep: cast w6 to bf16, pad w6/b6 to a multiple of TN, tile b6.

    Done once so steady-state forwards never re-read w6 in f32 or re-pad it.
    """
    out_dim = num_dims * num_points
    tn = _pick_tile_n(out_dim, max_tn)
    out_dim_pad = pl.cdiv(out_dim, tn) * tn

    w6 = params["w6"].astype(jnp.bfloat16)
    b6 = params["b6"].astype(jnp.float32)
    if out_dim_pad != out_dim:
        pad = out_dim_pad - out_dim
        w6 = jnp.pad(w6, ((0, 0), (0, pad)))
        b6 = jnp.pad(b6, ((0, 0), (0, pad)))
    num_tiles = out_dim_pad // tn
    b6_tiles = b6.reshape(num_tiles, tn)   # row j = bias for column tile j

    return {
        "w1": params["w1"].astype(jnp.float32),
        "b1": params["b1"].astype(jnp.float32),
        "w2": params["w2"].astype(jnp.float32),
        "b2": params["b2"].astype(jnp.float32),
        "w6": w6,                # (1024, out_dim_pad) bf16, pre-padded
        "b6": b6_tiles,          # (num_tiles, tn) f32
        "tn": tn,
        "out_dim": out_dim,
        "out_dim_pad": out_dim_pad,
    }


# ----------------------------------------------------------------------------- forward

def _fc12(x, w1, b1, w2, b2):
    B, bottleneck = x.shape
    const = lambda i: (0, 0)
    return pl.pallas_call(
        _fc12_kernel,
        out_shape=jax.ShapeDtypeStruct((B, 1024), jnp.bfloat16),
        grid_spec=pltpu.PrefetchScalarGridSpec(
            num_scalar_prefetch=0,
            grid=(1,),
            in_specs=[
                pl.BlockSpec((B, bottleneck), const),     # x
                pl.BlockSpec((bottleneck, 512), const),   # w1
                pl.BlockSpec((1, 512), const),            # b1
                pl.BlockSpec((512, 1024), const),         # w2
                pl.BlockSpec((1, 1024), const),           # b2
            ],
            out_specs=pl.BlockSpec((B, 1024), const),
        ),
        compiler_params=pltpu.CompilerParams(
            dimension_semantics=("arbitrary",),
        ),
    )(x, w1, b1, w2, b2)


def pointnet_decoder_fc(x, prepped, num_points, num_dims=3):
    """x: (B, bottleneck) float32. Returns (B, num_points, num_dims) float32."""
    B = x.shape[0]
    tn = prepped["tn"]
    out_dim = prepped["out_dim"]
    out_dim_pad = prepped["out_dim_pad"]
    num_tiles = out_dim_pad // tn

    # fc1 + fc2 (tiny) -> resident bf16 h2.
    h2 = _fc12(x, prepped["w1"], prepped["b1"], prepped["w2"], prepped["b2"])

    flops = 2 * B * 1024 * out_dim_pad
    bytes_accessed = (prepped["w6"].size * 2 + prepped["b6"].size * 4
                      + h2.size * 2 + B * out_dim_pad * 4)

    const = lambda j: (0, 0)   # resident operands
    tiled = lambda j: (0, j)   # streamed along fc6 output columns

    flat = pl.pallas_call(
        _fc6_kernel,
        out_shape=jax.ShapeDtypeStruct((B, out_dim_pad), jnp.float32),
        grid_spec=pltpu.PrefetchScalarGridSpec(
            num_scalar_prefetch=0,
            grid=(num_tiles,),
            in_specs=[
                pl.BlockSpec((B, 1024), const),          # h2, resident
                pl.BlockSpec((num_tiles, tn), const),    # b6 tile table, resident
                pl.BlockSpec((1024, tn), tiled),         # w6, streamed (dominant DMA)
            ],
            out_specs=pl.BlockSpec((B, tn), tiled),
        ),
        compiler_params=pltpu.CompilerParams(
            # No cross-step dependency anymore -> safe to shard across TCs.
            dimension_semantics=("parallel",),
            vmem_limit_bytes=_vmem_limit_bytes(B, tn, out_dim_pad),
        ),
        cost_estimate=pl.CostEstimate(flops=flops, transcendentals=0,
                                      bytes_accessed=bytes_accessed),
    )(h2, prepped["b6"], prepped["w6"])

    # Same semantics as torch: x.view(B, num_points, num_dims) on a row-major buffer.
    return flat[:, :out_dim].reshape(B, num_points, num_dims)


# ----------------------------------------------------------------------------- init / reference

def init_params(key, bottleneck, num_points, num_dims=3):
    """Deterministic init. Weights stored as (in_features, out_features) f32 masters."""
    k1, k2, k3, k4, k5, k6 = jax.random.split(key, 6)

    def lin(kw, kb, fan_in, fan_out):
        # torch.nn.Linear default: U(-1/sqrt(fan_in), 1/sqrt(fan_in))
        bound = 1.0 / jnp.sqrt(jnp.float32(fan_in))
        w = jax.random.uniform(kw, (fan_in, fan_out), jnp.float32, -bound, bound)
        b = jax.random.uniform(kb, (1, fan_out), jnp.float32, -bound, bound)
        return w, b

    w1, b1 = lin(k1, k2, bottleneck, 512)
    w2, b2 = lin(k3, k4, 512, 1024)
    w6, b6 = lin(k5, k6, 1024, num_dims * num_points)
    return {"w1": w1, "b1": b1, "w2": w2, "b2": b2, "w6": w6, "b6": b6}


def reference_f32(x, params):
    h1 = jnp.maximum(x @ params["w1"] + params["b1"], 0.0)
    h2 = jnp.maximum(h1 @ params["w2"] + params["b2"], 0.0)
    return h2 @ params["w6"] + params["b6"]


# ----------------------------------------------------------------------------- smoke test

if __name__ == "__main__":
    # Small shapes consistent with the module: hidden sizes 512/1024 are fixed by
    # __init__; small bottleneck / num_points for the smoke test.
    B = 2
    bottleneck = 128
    num_points = 256
    num_dims = 3

    key = jax.random.PRNGKey(0)
    kx, kp = jax.random.split(key)
    x = jax.random.normal(kx, (B, bottleneck), jnp.float32)
    params = init_params(kp, bottleneck, num_points, num_dims)

    ref = reference_f32(x, params).reshape(B, num_points, num_dims)
    # bf16 w6 / bf16 h2 + f32 accumulation -> tolerance scaled by output magnitude.
    tol = 2e-2 * (1.0 + float(jnp.max(jnp.abs(ref))))

    # (a) natural pad-aware tile (single wide tile for this small out_dim).
    prepped = prepare_decoder_params(params, num_points, num_dims)
    out = jax.block_until_ready(pointnet_decoder_fc(x, prepped, num_points, num_dims))
    assert out.shape == (B, num_points, num_dims), out.shape
    err = float(jnp.max(jnp.abs(out - ref)))
    assert err <= tol, f"mismatch vs reference (natural tile): {err} > {tol}"

    # (b) force a small tile so the multi-step streamed path (grid > 1,
    #     dynamic b6 row index, "parallel" column axis) is exercised too.
    prepped_small = prepare_decoder_params(params, num_points, num_dims, max_tn=256)
    out2 = jax.block_until_ready(pointnet_decoder_fc(x, prepped_small, num_points, num_dims))
    err2 = float(jnp.max(jnp.abs(out2 - ref)))
    assert err2 <= tol, f"mismatch vs reference (tn=256): {err2} > {tol}"

    print("KERNEL_OK")
</pallas_src>

<mosaic_0001>
module attributes {stable_mosaic.version = 11 : i64} {
  func.func @_fc12_kernel(%arg0: i32, %arg1: memref<2x128xf32, #tpu.memory_space<vmem>>, %arg2: memref<128x512xf32, #tpu.memory_space<vmem>>, %arg3: memref<1x512xf32, #tpu.memory_space<vmem>>, %arg4: memref<512x1024xf32, #tpu.memory_space<vmem>>, %arg5: memref<1x1024xf32, #tpu.memory_space<vmem>>, %arg6: memref<2x1024xbf16, #tpu.memory_space<vmem>>) attributes {dimension_semantics = [#tpu.dimension_semantics<arbitrary>], iteration_bounds = array<i64: 1>, scalar_prefetch = 0 : i64, scratch_operands = 0 : i64, tpu.core_type = #tpu.core_type<tc>, window_params = [{pipeline_mode = #tpu.pipeline_mode<synchronous>, transform_indices = @transform_0, window_bounds = array<i64: 2, 128>}, {pipeline_mode = #tpu.pipeline_mode<synchronous>, transform_indices = @transform_1, window_bounds = array<i64: 128, 512>}, {pipeline_mode = #tpu.pipeline_mode<synchronous>, transform_indices = @transform_2, window_bounds = array<i64: 1, 512>}, {pipeline_mode = #tpu.pipeline_mode<synchronous>, transform_indices = @transform_3, window_bounds = array<i64: 512, 1024>}, {pipeline_mode = #tpu.pipeline_mode<synchronous>, transform_indices = @transform_4, window_bounds = array<i64: 1, 1024>}, {pipeline_mode = #tpu.pipeline_mode<synchronous>, transform_indices = @transform_5, window_bounds = array<i64: 2, 1024>}]} {
    %c0 = arith.constant 0 : index
    %c0_0 = arith.constant 0 : index
    %0 = vector.load %arg1[%c0, %c0_0] : memref<2x128xf32, #tpu.memory_space<vmem>>, vector<2x128xf32>
    %c0_1 = arith.constant 0 : index
    %c0_2 = arith.constant 0 : index
    %1 = vector.load %arg2[%c0_1, %c0_2] : memref<128x512xf32, #tpu.memory_space<vmem>>, vector<128x512xf32>
    %cst = arith.constant dense<0.000000e+00> : vector<2x512xf32>
    %2 = tpu.matmul %0, %1, %cst {dimension_numbers = #tpu.dot_dimension_numbers<[1], [0], [0], [1], [0, 0, 1, 1], [], []>} : vector<2x128xf32>, vector<128x512xf32>, vector<2x512xf32> -> vector<2x512xf32>
    %c0_3 = arith.constant 0 : index
    %c0_4 = arith.constant 0 : index
    %3 = vector.load %arg3[%c0_3, %c0_4] : memref<1x512xf32, #tpu.memory_space<vmem>>, vector<1x512xf32>
    %4 = vector.broadcast %3 : vector<1x512xf32> to vector<2x512xf32>
    %5 = arith.addf %2, %4 : vector<2x512xf32>
    %cst_5 = arith.constant 0.000000e+00 : f32
    %6 = vector.broadcast %cst_5 : f32 to vector<2x512xf32>
    %7 = arith.maximumf %5, %6 : vector<2x512xf32>
    %c0_6 = arith.constant 0 : index
    %c0_7 = arith.constant 0 : index
    %8 = vector.load %arg4[%c0_6, %c0_7] : memref<512x1024xf32, #tpu.memory_space<vmem>>, vector<512x1024xf32>
    %cst_8 = arith.constant dense<0.000000e+00> : vector<2x1024xf32>
    %9 = tpu.matmul %7, %8, %cst_8 {dimension_numbers = #tpu.dot_dimension_numbers<[1], [0], [0], [1], [0, 0, 1, 1], [], []>} : vector<2x512xf32>, vector<512x1024xf32>, vector<2x1024xf32> -> vector<2x1024xf32>
    %c0_9 = arith.constant 0 : index
    %c0_10 = arith.constant 0 : index
    %10 = vector.load %arg5[%c0_9, %c0_10] : memref<1x1024xf32, #tpu.memory_space<vmem>>, vector<1x1024xf32>
    %11 = vector.broadcast %10 : vector<1x1024xf32> to vector<2x1024xf32>
    %12 = arith.addf %9, %11 : vector<2x1024xf32>
    %cst_11 = arith.constant 0.000000e+00 : f32
    %13 = vector.broadcast %cst_11 : f32 to vector<2x1024xf32>
    %14 = arith.maximumf %12, %13 : vector<2x1024xf32>
    %15 = arith.truncf %14 : vector<2x1024xf32> to vector<2x1024xbf16>
    %c0_12 = arith.constant 0 : index
    %c0_13 = arith.constant 0 : index
    %16 = vector.load %arg6[%c0_12, %c0_13] : memref<2x1024xbf16, #tpu.memory_space<vmem>>, vector<2x1024xbf16>
    tpu.vector_store %arg6[%c0_12, %c0_13], %15 {strides = array<i32>} : memref<2x1024xbf16, #tpu.memory_space<vmem>>, vector<2x1024xbf16>,
    return
  }
  func.func @transform_0(%arg0: i32) -> (i32, i32) {
    %c0_i32 = arith.constant 0 : i32
    %c0_i32_0 = arith.constant 0 : i32
    %c0_i32_1 = arith.constant 0 : i32
    return %c0_i32, %c0_i32_0 : i32, i32
  }
  func.func @transform_1(%arg0: i32) -> (i32, i32) {
    %c0_i32 = arith.constant 0 : i32
    %c0_i32_0 = arith.constant 0 : i32
    %c0_i32_1 = arith.constant 0 : i32
    return %c0_i32, %c0_i32_0 : i32, i32
  }
  func.func @transform_2(%arg0: i32) -> (i32, i32) {
    %c0_i32 = arith.constant 0 : i32
    %c0_i32_0 = arith.constant 0 : i32
    %c0_i32_1 = arith.constant 0 : i32
    return %c0_i32, %c0_i32_0 : i32, i32
  }
  func.func @transform_3(%arg0: i32) -> (i32, i32) {
    %c0_i32 = arith.constant 0 : i32
    %c0_i32_0 = arith.constant 0 : i32
    %c0_i32_1 = arith.constant 0 : i32
    return %c0_i32, %c0_i32_0 : i32, i32
  }
  func.func @transform_4(%arg0: i32) -> (i32, i32) {
    %c0_i32 = arith.constant 0 : i32
    %c0_i32_0 = arith.constant 0 : i32
    %c0_i32_1 = arith.constant 0 : i32
    return %c0_i32, %c0_i32_0 : i32, i32
  }
  func.func @transform_5(%arg0: i32) -> (i32, i32) {
    %c0_i32 = arith.constant 0 : i32
    %c0_i32_0 = arith.constant 0 : i32
    %c0_i32_1 = arith.constant 0 : i32
    return %c0_i32, %c0_i32_0 : i32, i32
  }
}

</mosaic_0001>

<llo_original>
// kernel: tpu_custom_call.1
$region0: #{tpu_custom_call.1}
  #allocation0 [shape = 'u32[]', space=smem, size = 0x4, offset = 0x4, fixed_abs, tag = 'smem constant byte address 0x4 - core index']
  #allocation1 [shape = 'u32[144,128]{1,0:T(1,128)}', space=vmem, size = 0x12000, scoped, tag = 'internal scratch']
  %s0 = inlined_call_operand.hbm [shape: f32[2,128], index: 0, kind: input, shape index: {}]
  %s1 = inlined_call_operand.hbm [shape: f32[128,512], index: 1, kind: input, shape index: {}]
  %s2 = inlined_call_operand.hbm [shape: f32[1,512], index: 2, kind: input, shape index: {}]
  %s3 = inlined_call_operand.hbm [shape: f32[512,1024], index: 3, kind: input, shape index: {}]
  %s4 = inlined_call_operand.hbm [shape: f32[1,1024], index: 4, kind: input, shape index: {}]
  %s5 = inlined_call_operand.hbm [shape: bf16[2,1024], index: 5, kind: output, shape index: {}]
  %s6 = sld [smem:[#allocation0]]
  $region50: #{tpu_custom_call.1} parent=0
    _
  %s8 = ssub.s32 1, %s6
  %s9 = scalar_select 0, %s8, %s6
  $region1: #{tpu_custom_call.1} parent=0
    #allocation2 [shape = 'u8[1024]{0}', space=vmem, size = 0x400, scoped, tag = 'input window, operand 0, single buffered']
    #allocation3 [shape = 's32[1]{0}', space=sflag, size = 0x4, scoped, tag = 'scoped memory for tpu_custom_call.1']
    #allocation4 [shape = 's32[1]{0}', space=sflag, size = 0x4, scoped, tag = 'scoped memory for tpu_custom_call.1']
    #allocation5 [shape = 'u8[262144]{0}', space=vmem, size = 0x40000, scoped, tag = 'input window, operand 1, single buffered']
    #allocation6 [shape = 's32[1]{0}', space=sflag, size = 0x4, scoped, tag = 'scoped memory for tpu_custom_call.1']
    #allocation7 [shape = 'u8[2048]{0}', space=vmem, size = 0x800, scoped, tag = 'input window, operand 2, single buffered']
    #allocation8 [shape = 'u8[2097152]{0}', space=vmem, size = 0x200000, scoped, tag = 'input window, operand 3, single buffered']
    #allocation9 [shape = 's32[1]{0}', space=sflag, size = 0x4, scoped, tag = 'scoped memory for tpu_custom_call.1']
    #allocation10 [shape = 'u8[4096]{0}', space=vmem, size = 0x1000, scoped, tag = 'input window, operand 4, single buffered']
    #allocation11 [shape = 'u8[4096]{0}', space=vmem, size = 0x1000, scoped, tag = 'output window, operand 0, single buffered']
    %10 = vsyncpa [#allocation3], 0
    %11 = vsyncpa [#allocation6], 0
    %12 = vsyncpa [#allocation9], 0
    %13 = vsyncpa [#allocation4], 0
    // Predicated region
    $region2: #{tpu_custom_call.1} parent=1 // pred_check
      _
    $region3: #{tpu_custom_call.1} parent=1 // pred_check_branch
      %15 = sbr.rel (0) target = $region5
    $region4: #{tpu_custom_call.1} parent=1 // pred_region
      %s17 = ssub.s32 32, 32
      %18 = vsyncadd [#allocation3], %s17
      %s20 = sshll.u32 [#allocation2], 4
      %s21 = int_to_ptr.vmem [resolvable:$true] %s20
      %23 = dma.hbm_to_vmem [thread:$0]  %s0, 32, %s21, [#allocation3]
    $region5: #{tpu_custom_call.1} parent=1 // pred_fallthru
      _
    // Predicated region
    $region6: #{tpu_custom_call.1} parent=1 // pred_check
      _
    $region7: #{tpu_custom_call.1} parent=1 // pred_check_branch
      %25 = sbr.rel (0) target = $region9
    $region8: #{tpu_custom_call.1} parent=1 // pred_region
      %s27 = ssub.s32 8192, 8192
      %28 = vsyncadd [#allocation6], %s27
      %s29 = sshll.u32 [#allocation5], 4
      %s30 = int_to_ptr.vmem [resolvable:$true] %s29
      %35 = dma.hbm_to_vmem [thread:$0]  %s1, 8192, %s30, [#allocation6], 512, 512, 32
    $region9: #{tpu_custom_call.1} parent=1 // pred_fallthru
      _
    // Predicated region
    $region10: #{tpu_custom_call.1} parent=1 // pred_check
      _
    $region11: #{tpu_custom_call.1} parent=1 // pred_check_branch
      %37 = sbr.rel (0) target = $region13
    $region12: #{tpu_custom_call.1} parent=1 // pred_region
      %s39 = ssub.s32 64, 64
      %40 = vsyncadd [#allocation6], %s39
      %s42 = sshll.u32 [#allocation7], 4
      %s43 = int_to_ptr.vmem [resolvable:$true] %s42
      %45 = dma.hbm_to_vmem [thread:$0]  %s2, 64, %s43, [#allocation6]
    $region13: #{tpu_custom_call.1} parent=1 // pred_fallthru
      _
    // Predicated region
    $region14: #{tpu_custom_call.1} parent=1 // pred_check
      _
    $region15: #{tpu_custom_call.1} parent=1 // pred_check_branch
      %47 = sbr.rel (0) target = $region17
    $region16: #{tpu_custom_call.1} parent=1 // pred_region
      %s49 = ssub.s32 65536, 65536
      %50 = vsyncadd [#allocation9], %s49
      %s51 = sshll.u32 [#allocation8], 4
      %s52 = int_to_ptr.vmem [resolvable:$true] %s51
      %57 = dma.hbm_to_vmem [thread:$0]  %s3, 65536, %s52, [#allocation9], 1024, 1024, 64
    $region17: #{tpu_custom_call.1} parent=1 // pred_fallthru
      _
    // Predicated region
    $region18: #{tpu_custom_call.1} parent=1 // pred_check
      _
    $region19: #{tpu_custom_call.1} parent=1 // pred_check_branch
      %59 = sbr.rel (0) target = $region21
    $region20: #{tpu_custom_call.1} parent=1 // pred_region
      %s61 = ssub.s32 128, 128
      %62 = vsyncadd [#allocation9], %s61
      %s64 = sshll.u32 [#allocation10], 4
      %s65 = int_to_ptr.vmem [resolvable:$true] %s64
      %67 = dma.hbm_to_vmem [thread:$0]  %s4, 128, %s65, [#allocation9]
    $region21: #{tpu_custom_call.1} parent=1 // pred_fallthru
      _
    // Predicated region
    $region22: #{tpu_custom_call.1} parent=1 // pred_check
      _
    $region23: #{tpu_custom_call.1} parent=1 // pred_check_branch
      %69 = sbr.rel (0) target = $region25
    $region24: #{tpu_custom_call.1} parent=1 // pred_region
      %70 = dma.done [#allocation3], 32
    $region25: #{tpu_custom_call.1} parent=1 // pred_fallthru
      _
    // Predicated region
    $region26: #{tpu_custom_call.1} parent=1 // pred_check
      _
    $region27: #{tpu_custom_call.1} parent=1 // pred_check_branch
      %72 = sbr.rel (0) target = $region29
    $region28: #{tpu_custom_call.1} parent=1 // pred_region
      %73 = dma.done [#allocation6], 8192
    $region29: #{tpu_custom_call.1} parent=1 // pred_fallthru
      _
    // Predicated region
    $region30: #{tpu_custom_call.1} parent=1 // pred_check
      _
    $region31: #{tpu_custom_call.1} parent=1 // pred_check_branch
      %75 = sbr.rel (0) target = $region33
    $region32: #{tpu_custom_call.1} parent=1 // pred_region
      %76 = dma.done [#allocation6], 64
    $region33: #{tpu_custom_call.1} parent=1 // pred_fallthru
      _
    // Predicated region
    $region34: #{tpu_custom_call.1} parent=1 // pred_check
      _
    $region35: #{tpu_custom_call.1} parent=1 // pred_check_branch
      %78 = sbr.rel (0) target = $region37
    $region36: #{tpu_custom_call.1} parent=1 // pred_region
      %79 = dma.done [#allocation9], 65536
    $region37: #{tpu_custom_call.1} parent=1 // pred_fallthru
      _
    // Predicated region
    $region38: #{tpu_custom_call.1} parent=1 // pred_check
      _
    $region39: #{tpu_custom_call.1} parent=1 // pred_check_branch
      %81 = sbr.rel (0) target = $region41
    $region40: #{tpu_custom_call.1} parent=1 // pred_region
      %82 = dma.done [#allocation9], 128
    $region41: #{tpu_custom_call.1} parent=1 // pred_fallthru
      _
    %v83 = vld [vmem:[#allocation2] sm:$0x3]
    %v84 = vld [vmem:[#allocation5] sm:$0xff]
    %v85 = vld [vmem:[#allocation5 + $0x8] sm:$0xff]
    %v86 = vld [vmem:[#allocation5 + $0x10] sm:$0xff]
    %v87 = vld [vmem:[#allocation5 + $0x18] sm:$0xff]
    %v88 = vld [vmem:[#allocation5 + $0x20] sm:$0xff]
    %v89 = vld [vmem:[#allocation5 + $0x28] sm:$0xff]
    %v90 = vld [vmem:[#allocation5 + $0x30] sm:$0xff]
    %v91 = vld [vmem:[#allocation5 + $0x38] sm:$0xff]
    %v92 = vld [vmem:[#allocation5 + $0x40] sm:$0xff]
    %v93 = vld [vmem:[#allocation5 + $0x48] sm:$0xff]
    %v94 = vld [vmem:[#allocation5 + $0x50] sm:$0xff]
    %v95 = vld [vmem:[#allocation5 + $0x58] sm:$0xff]
    %v96 = vld [vmem:[#allocation5 + $0x60] sm:$0xff]
    %v97 = vld [vmem:[#allocation5 + $0x68] sm:$0xff]
    %v98 = vld [vmem:[#allocation5 + $0x70] sm:$0xff]
    %v99 = vld [vmem:[#allocation5 + $0x78] sm:$0xff]
    %v100 = vld [vmem:[#allocation5 + $0x80] sm:$0xff]
    %v101 = vld [vmem:[#allocation5 + $0x88] sm:$0xff]
    %v102 = vld [vmem:[#allocation5 + $0x90] sm:$0xff]
    %v103 = vld [vmem:[#allocation5 + $0x98] sm:$0xff]
    %v104 = vld [vmem:[#allocation5 + $0xa0] sm:$0xff]
    %v105 = vld [vmem:[#allocation5 + $0xa8] sm:$0xff]
    %v106 = vld [vmem:[#allocation5 + $0xb0] sm:$0xff]
    %v107 = vld [vmem:[#allocation5 + $0xb8] sm:$0xff]
    %v108 = vld [vmem:[#allocation5 + $0xc0] sm:$0xff]
    %v109 = vld [vmem:[#allocation5 + $0xc8] sm:$0xff]
    %v110 = vld [vmem:[#allocation5 + $0xd0] sm:$0xff]
    %v111 = vld [vmem:[#allocation5 + $0xd8] sm:$0xff]
    %v112 = vld [vmem:[#allocation5 + $0xe0] sm:$0xff]
    %v113 = vld [vmem:[#allocation5 + $0xe8] sm:$0xff]
    %v114 = vld [vmem:[#allocation5 + $0xf0] sm:$0xff]
    %v115 = vld [vmem:[#allocation5 + $0xf8] sm:$0xff]
    %v116 = vld [vmem:[#allocation5 + $0x100] sm:$0xff]
    %v117 = vld [vmem:[#allocation5 + $0x108] sm:$0xff]
    %v118 = vld [vmem:[#allocation5 + $0x110] sm:$0xff]
    %v119 = vld [vmem:[#allocation5 + $0x118] sm:$0xff]
    %v120 = vld [vmem:[#allocation5 + $0x120] sm:$0xff]
    %v121 = vld [vmem:[#allocation5 + $0x128] sm:$0xff]
    %v122 = vld [vmem:[#allocation5 + $0x130] sm:$0xff]
    %v123 = vld [vmem:[#allocation5 + $0x138] sm:$0xff]
    %v124 = vld [vmem:[#allocation5 + $0x140] sm:$0xff]
    %v125 = vld [vmem:[#allocation5 + $0x148] sm:$0xff]
    %v126 = vld [vmem:[#allocation5 + $0x150] sm:$0xff]
    %v127 = vld [vmem:[#allocation5 + $0x158] sm:$0xff]
    %v128 = vld [vmem:[#allocation5 + $0x160] sm:$0xff]
    %v129 = vld [vmem:[#allocation5 + $0x168] sm:$0xff]
    %v130 = vld [vmem:[#allocation5 + $0x170] sm:$0xff]
    %v131 = vld [vmem:[#allocation5 + $0x178] sm:$0xff]
    %v132 = vld [vmem:[#allocation5 + $0x180] sm:$0xff]
    %v133 = vld [vmem:[#allocation5 + $0x188] sm:$0xff]
    %v134 = vld [vmem:[#allocation5 + $0x190] sm:$0xff]
    %v135 = vld [vmem:[#allocation5 + $0x198] sm:$0xff]
    %v136 = vld [vmem:[#allocation5 + $0x1a0] sm:$0xff]
    %v137 = vld [vmem:[#allocation5 + $0x1a8] sm:$0xff]
    %v138 = vld [vmem:[#allocation5 + $0x1b0] sm:$0xff]
    %v139 = vld [vmem:[#allocation5 + $0x1b8] sm:$0xff]
    %v140 = vld [vmem:[#allocation5 + $0x1c0] sm:$0xff]
    %v141 = vld [vmem:[#allocation5 + $0x1c8] sm:$0xff]
    %v142 = vld [vmem:[#allocation5 + $0x1d0] sm:$0xff]
    %v143 = vld [vmem:[#allocation5 + $0x1d8] sm:$0xff]
    %v144 = vld [vmem:[#allocation5 + $0x1e0] sm:$0xff]
    %v145 = vld [vmem:[#allocation5 + $0x1e8] sm:$0xff]
    %v146 = vld [vmem:[#allocation5 + $0x1f0] sm:$0xff]
    %v147 = vld [vmem:[#allocation5 + $0x1f8] sm:$0xff]
    %v148 = vld [vmem:[#allocation7] sm:$0xf]
    %v150 = vlaneseq
    %v151 = vshrl.u32 %v150, 7
    %v152 = vsub.s32 0, %v151
    %v153 = vrot.slane %v148, %v152
    %v154 = vlaneseq
    %v155 = vshrl.u32 %v154, 7
    %v156 = vsub.s32 1, %v155
    %v157 = vrot.slane %v148, %v156
    %v158 = vlaneseq
    %v159 = vshrl.u32 %v158, 7
    %v160 = vsub.s32 2, %v159
    %v161 = vrot.slane %v148, %v160
    %v162 = vlaneseq
    %v163 = vshrl.u32 %v162, 7
    %v164 = vsub.s32 3, %v163
    %v165 = vrot.slane %v148, %v164
    %170 = vmatprep.subr.mxu0 %v145
    %171 = vmatpush1.msra.mxu0 %v144
    %172 = vmatprep.subr.mxu0 %v141
    %173 = vmatpush1.msra.mxu0 %v140
    %174 = vmatprep.subr.mxu0 %v137
    %175 = vmatpush1.msra.mxu0 %v136
    %176 = vmatprep.subr.mxu0 %v133
    %177 = vmatpush1.msra.mxu0 %v132
    %178 = vmatprep.subr.mxu0 %v129
    %179 = vmatpush1.msra.mxu0 %v128
    %180 = vmatprep.subr.mxu0 %v125
    %181 = vmatpush1.msra.mxu0 %v124
    %182 = vmatprep.subr.mxu0 %v121
    %183 = vmatpush1.msra.mxu0 %v120
    %184 = vmatprep.subr.mxu0 %v117
    %185 = vmatpush1.msra.mxu0 %v116
    %186 = vmatprep.subr.mxu0 %v113
    %187 = vmatpush1.msra.mxu0 %v112
    %188 = vmatprep.subr.mxu0 %v109
    %189 = vmatpush1.msra.mxu0 %v108
    %190 = vmatprep.subr.mxu0 %v105
    %191 = vmatpush1.msra.mxu0 %v104
    %192 = vmatprep.subr.mxu0 %v101
    %193 = vmatpush1.msra.mxu0 %v100
    %194 = vmatprep.subr.mxu0 %v97
    %195 = vmatpush1.msra.mxu0 %v96
    %196 = vmatprep.subr.mxu0 %v93
    %197 = vmatpush1.msra.mxu0 %v92
    %198 = vmatprep.subr.mxu0 %v89
    %199 = vmatpush1.msra.mxu0 %v88
    %200 = vmatprep.subr.mxu0 %v85
    %201 = vmatpush1.msra.mxu0 %v84
    %202 = vmatprep.subr.mxu0 0.0
    %203 = vmatpush2.msra.mxu0 0.0
    %204 = vmatprep.subr.mxu0 0.0
    %205 = vmatpush2.msra.mxu0 0.0
    %206 = vmatprep.subr.mxu0 0.0
    %207 = vmatpush2.msra.mxu0 0.0
    %208 = vmatprep.subr.mxu0 0.0
    %209 = vmatpush2.msra.mxu0 0.0
    %210 = vmatprep.subr.mxu0 0.0
    %211 = vmatpush2.msra.mxu0 0.0
    %212 = vmatprep.subr.mxu0 0.0
    %213 = vmatpush2.msra.mxu0 0.0
    %214 = vmatprep.subr.mxu0 0.0
    %215 = vmatpush2.msra.mxu0 0.0
    %216 = vmatprep.subr.mxu0 0.0
    %217 = vmatpush2.msra.mxu0 0.0
    %218 = vmatprep.subr.mxu0 0.0
    %219 = vmatpush2.msra.mxu0 0.0
    %220 = vmatprep.subr.mxu0 0.0
    %221 = vmatpush2.msra.mxu0 0.0
    %222 = vmatprep.subr.mxu0 0.0
    %223 = vmatpush2.msra.mxu0 0.0
    %224 = vmatprep.subr.mxu0 0.0
    %225 = vmatpush2.msra.mxu0 0.0
    %226 = vmatprep.subr.mxu0 0.0
    %227 = vmatpush2.msra.mxu0 0.0
    %228 = vmatprep.subr.mxu0 0.0
    %229 = vmatpush2.msra.mxu0 0.0
    %230 = vmatprep.subr.mxu0 0.0
    %231 = vmatpush2.msra.mxu0 0.0
    %232 = vmatprep.subr.mxu0 0.0
    %233 = vmatpush2.msra.mxu0 0.0
    %234 = vmatprep.mubr.f32.mxu0 0.0
    %235 = vmatmul.mubr.f32.gmra.mxu0 %v83
    %v236 = vpop.f32.mrf.mxu0
    %v237 = vadd.f32 %v153, %v236
    %v238 = vpop.f32.mrf.mxu0
    %v239 = vadd.f32 %v157, %v238
    %240 = vdwg.mxu0
    %241 = vmatprep.subr.mxu0 %v147
    %242 = vmatpush1.msra.mxu0 %v146
    %243 = vmatprep.subr.mxu0 %v143
    %244 = vmatpush1.msra.mxu0 %v142
    %245 = vmatprep.subr.mxu0 %v139
    %246 = vmatpush1.msra.mxu0 %v138
    %247 = vmatprep.subr.mxu0 %v135
    %248 = vmatpush1.msra.mxu0 %v134
    %249 = vmatprep.subr.mxu0 %v131
    %250 = vmatpush1.msra.mxu0 %v130
    %251 = vmatprep.subr.mxu0 %v127
    %252 = vmatpush1.msra.mxu0 %v126
    %253 = vmatprep.subr.mxu0 %v123
    %254 = vmatpush1.msra.mxu0 %v122
    %255 = vmatprep.subr.mxu0 %v119
    %256 = vmatpush1.msra.mxu0 %v118
    %257 = vmatprep.subr.mxu0 %v115
    %258 = vmatpush1.msra.mxu0 %v114
    %259 = vmatprep.subr.mxu0 %v111
    %260 = vmatpush1.msra.mxu0 %v110
    %261 = vmatprep.subr.mxu0 %v107
    %262 = vmatpush1.msra.mxu0 %v106
    %263 = vmatprep.subr.mxu0 %v103
    %264 = vmatpush1.msra.mxu0 %v102
    %265 = vmatprep.subr.mxu0 %v99
    %266 = vmatpush1.msra.mxu0 %v98
    %267 = vmatprep.subr.mxu0 %v95
    %268 = vmatpush1.msra.mxu0 %v94
    %269 = vmatprep.subr.mxu0 %v91
    %270 = vmatpush1.msra.mxu0 %v90
    %271 = vmatprep.subr.mxu0 %v87
    %272 = vmatpush1.msra.mxu0 %v86
    %273 = vmatprep.subr.mxu0 0.0
    %274 = vmatpush2.msra.mxu0 0.0
    %275 = vmatprep.subr.mxu0 0.0
    %276 = vmatpush2.msra.mxu0 0.0
    %277 = vmatprep.subr.mxu0 0.0
    %278 = vmatpush2.msra.mxu0 0.0
    %279 = vmatprep.subr.mxu0 0.0
    %280 = vmatpush2.msra.mxu0 0.0
    %281 = vmatprep.subr.mxu0 0.0
    %282 = vmatpush2.msra.mxu0 0.0
    %283 = vmatprep.subr.mxu0 0.0
    %284 = vmatpush2.msra.mxu0 0.0
    %285 = vmatprep.subr.mxu0 0.0
    %286 = vmatpush2.msra.mxu0 0.0
    %287 = vmatprep.subr.mxu0 0.0
    %288 = vmatpush2.msra.mxu0 0.0
    %289 = vmatprep.subr.mxu0 0.0
    %290 = vmatpush2.msra.mxu0 0.0
    %291 = vmatprep.subr.mxu0 0.0
    %292 = vmatpush2.msra.mxu0 0.0
    %293 = vmatprep.subr.mxu0 0.0
    %294 = vmatpush2.msra.mxu0 0.0
    %295 = vmatprep.subr.mxu0 0.0
    %296 = vmatpush2.msra.mxu0 0.0
    %297 = vmatprep.subr.mxu0 0.0
    %298 = vmatpush2.msra.mxu0 0.0
    %299 = vmatprep.subr.mxu0 0.0
    %300 = vmatpush2.msra.mxu0 0.0
    %301 = vmatprep.subr.mxu0 0.0
    %302 = vmatpush2.msra.mxu0 0.0
    %303 = vmatprep.subr.mxu0 0.0
    %304 = vmatpush2.msra.mxu0 0.0
    %305 = vmatprep.mubr.f32.mxu0 0.0
    %306 = vmatmul.mubr.f32.gmra.mxu0 %v83
    %v307 = vpop.f32.mrf.mxu0
    %v308 = vadd.f32 %v161, %v307
    %v309 = vpop.f32.mrf.mxu0
    %v310 = vadd.f32 %v165, %v309
    %311 = vdwg.mxu0
    %v312 = vmax.f32 %v237, 0.0
    %v313 = vmax.f32 %v239, 0.0
    %v314 = vmax.f32 %v308, 0.0
    %v315 = vmax.f32 %v310, 0.0
    %v316 = vld [vmem:[#allocation8] sm:$0xff]
    %v317 = vld [vmem:[#allocation8 + $0x8] sm:$0xff]
    %v318 = vld [vmem:[#allocation8 + $0x10] sm:$0xff]
    %v319 = vld [vmem:[#allocation8 + $0x18] sm:$0xff]
    %v320 = vld [vmem:[#allocation8 + $0x20] sm:$0xff]
    %v321 = vld [vmem:[#allocation8 + $0x28] sm:$0xff]
    %v322 = vld [vmem:[#allocation8 + $0x30] sm:$0xff]
    %v323 = vld [vmem:[#allocation8 + $0x38] sm:$0xff]
    %v324 = vld [vmem:[#allocation8 + $0x40] sm:$0xff]
    %v325 = vld [vmem:[#allocation8 + $0x48] sm:$0xff]
    %v326 = vld [vmem:[#allocation8 + $0x50] sm:$0xff]
    %v327 = vld [vmem:[#allocation8 + $0x58] sm:$0xff]
    %v328 = vld [vmem:[#allocation8 + $0x60] sm:$0xff]
    %v329 = vld [vmem:[#allocation8 + $0x68] sm:$0xff]
    %v330 = vld [vmem:[#allocation8 + $0x70] sm:$0xff]
    %v331 = vld [vmem:[#allocation8 + $0x78] sm:$0xff]
    %v332 = vld [vmem:[#allocation8 + $0x80] sm:$0xff]
    %v333 = vld [vmem:[#allocation8 + $0x88] sm:$0xff]
    %v334 = vld [vmem:[#allocation8 + $0x90] sm:$0xff]
    %v335 = vld [vmem:[#allocation8 + $0x98] sm:$0xff]
    %v336 = vld [vmem:[#allocation8 + $0xa0] sm:$0xff]
    %v337 = vld [vmem:[#allocation8 + $0xa8] sm:$0xff]
    %v338 = vld [vmem:[#allocation8 + $0xb0] sm:$0xff]
    %v339 = vld [vmem:[#allocation8 + $0xb8] sm:$0xff]
    %v340 = vld [vmem:[#allocation8 + $0xc0] sm:$0xff]
    %v341 = vld [vmem:[#allocation8 + $0xc8] sm:$0xff]
    %v342 = vld [vmem:[#allocation8 + $0xd0] sm:$0xff]
    %v343 = vld [vmem:[#allocation8 + $0xd8] sm:$0xff]
    %v344 = vld [vmem:[#allocation8 + $0xe0] sm:$0xff]
    %v345 = vld [vmem:[#allocation8 + $0xe8] sm:$0xff]
    %v346 = vld [vmem:[#allocation8 + $0xf0] sm:$0xff]
    %v347 = vld [vmem:[#allocation8 + $0xf8] sm:$0xff]
    %v348 = vld [vmem:[#allocation8 + $0x100] sm:$0xff]
    %v349 = vld [vmem:[#allocation8 + $0x108] sm:$0xff]
    %v350 = vld [vmem:[#allocation8 + $0x110] sm:$0xff]
    %v351 = vld [vmem:[#allocation8 + $0x118] sm:$0xff]
    %v352 = vld [vmem:[#allocation8 + $0x120] sm:$0xff]
    %v353 = vld [vmem:[#allocation8 + $0x128] sm:$0xff]
    %v354 = vld [vmem:[#allocation8 + $0x130] sm:$0xff]
    %v355 = vld [vmem:[#allocation8 + $0x138] sm:$0xff]
    %v356 = vld [vmem:[#allocation8 + $0x140] sm:$0xff]
    %v357 = vld [vmem:[#allocation8 + $0x148] sm:$0xff]
    %v358 = vld [vmem:[#allocation8 + $0x150] sm:$0xff]
    %v359 = vld [vmem:[#allocation8 + $0x158] sm:$0xff]
    %v360 = vld [vmem:[#allocation8 + $0x160] sm:$0xff]
    %v361 = vld [vmem:[#allocation8 + $0x168] sm:$0xff]
    %v362 = vld [vmem:[#allocation8 + $0x170] sm:$0xff]
    %v363 = vld [vmem:[#allocation8 + $0x178] sm:$0xff]
    %v364 = vld [vmem:[#allocation8 + $0x180] sm:$0xff]
    %v365 = vld [vmem:[#allocation8 + $0x188] sm:$0xff]
    %v366 = vld [vmem:[#allocation8 + $0x190] sm:$0xff]
    %v367 = vld [vmem:[#allocation8 + $0x198] sm:$0xff]
    %v368 = vld [vmem:[#allocation8 + $0x1a0] sm:$0xff]
    %v369 = vld [vmem:[#allocation8 + $0x1a8] sm:$0xff]
    %v370 = vld [vmem:[#allocation8 + $0x1b0] sm:$0xff]
    %v371 = vld [vmem:[#allocation8 + $0x1b8] sm:$0xff]
    %v372 = vld [vmem:[#allocation8 + $0x1c0] sm:$0xff]
    %v373 = vld [vmem:[#allocation8 + $0x1c8] sm:$0xff]
    %v374 = vld [vmem:[#allocation8 + $0x1d0] sm:$0xff]
    %v375 = vld [vmem:[#allocation8 + $0x1d8] sm:$0xff]
    %v376 = vld [vmem:[#allocation8 + $0x1e0] sm:$0xff]
    %v377 = vld [vmem:[#allocation8 + $0x1e8] sm:$0xff]
    %v378 = vld [vmem:[#allocation8 + $0x1f0] sm:$0xff]
    %v379 = vld [vmem:[#allocation8 + $0x1f8] sm:$0xff]
    %v380 = vld [vmem:[#allocation8 + $0x200] sm:$0xff]
    %v381 = vld [vmem:[#allocation8 + $0x208] sm:$0xff]
    %v382 = vld [vmem:[#allocation8 + $0x210] sm:$0xff]
    %v383 = vld [vmem:[#allocation8 + $0x218] sm:$0xff]
    %v384 = vld [vmem:[#allocation8 + $0x220] sm:$0xff]
    %v385 = vld [vmem:[#allocation8 + $0x228] sm:$0xff]
    %v386 = vld [vmem:[#allocation8 + $0x230] sm:$0xff]
    %v387 = vld [vmem:[#allocation8 + $0x238] sm:$0xff]
    %v388 = vld [vmem:[#allocation8 + $0x240] sm:$0xff]
    %v389 = vld [vmem:[#allocation8 + $0x248] sm:$0xff]
    %v390 = vld [vmem:[#allocation8 + $0x250] sm:$0xff]
    %v391 = vld [vmem:[#allocation8 + $0x258] sm:$0xff]
    %v392 = vld [vmem:[#allocation8 + $0x260] sm:$0xff]
    %v393 = vld [vmem:[#allocation8 + $0x268] sm:$0xff]
    %v394 = vld [vmem:[#allocation8 + $0x270] sm:$0xff]
    %v395 = vld [vmem:[#allocation8 + $0x278] sm:$0xff]
    %v396 = vld [vmem:[#allocation8 + $0x280] sm:$0xff]
    %v397 = vld [vmem:[#allocation8 + $0x288] sm:$0xff]
    %v398 = vld [vmem:[#allocation8 + $0x290] sm:$0xff]
    %v399 = vld [vmem:[#allocation8 + $0x298] sm:$0xff]
    %v400 = vld [vmem:[#allocation8 + $0x2a0] sm:$0xff]
    %v401 = vld [vmem:[#allocation8 + $0x2a8] sm:$0xff]
    %v402 = vld [vmem:[#allocation8 + $0x2b0] sm:$0xff]
    %v403 = vld [vmem:[#allocation8 + $0x2b8] sm:$0xff]
    %v404 = vld [vmem:[#allocation8 + $0x2c0] sm:$0xff]
    %v405 = vld [vmem:[#allocation8 + $0x2c8] sm:$0xff]
    %v406 = vld [vmem:[#allocation8 + $0x2d0] sm:$0xff]
    %v407 = vld [vmem:[#allocation8 + $0x2d8] sm:$0xff]
    %v408 = vld [vmem:[#allocation8 + $0x2e0] sm:$0xff]
    %v409 = vld [vmem:[#allocation8 + $0x2e8] sm:$0xff]
    %v410 = vld [vmem:[#allocation8 + $0x2f0] sm:$0xff]
    %v411 = vld [vmem:[#allocation8 + $0x2f8] sm:$0xff]
    %v412 = vld [vmem:[#allocation8 + $0x300] sm:$0xff]
    %v413 = vld [vmem:[#allocation8 + $0x308] sm:$0xff]
    %v414 = vld [vmem:[#allocation8 + $0x310] sm:$0xff]
    %v415 = vld [vmem:[#allocation8 + $0x318] sm:$0xff]
    %v416 = vld [vmem:[#allocation8 + $0x320] sm:$0xff]
    %v417 = vld [vmem:[#allocation8 + $0x328] sm:$0xff]
    %v418 = vld [vmem:[#allocation8 + $0x330] sm:$0xff]
    %v419 = vld [vmem:[#allocation8 + $0x338] sm:$0xff]
    %v420 = vld [vmem:[#allocation8 + $0x340] sm:$0xff]
    %v421 = vld [vmem:[#allocation8 + $0x348] sm:$0xff]
    %v422 = vld [vmem:[#allocation8 + $0x350] sm:$0xff]
    %v423 = vld [vmem:[#allocation8 + $0x358] sm:$0xff]
    %v424 = vld [vmem:[#allocation8 + $0x360] sm:$0xff]
    %v425 = vld [vmem:[#allocation8 + $0x368] sm:$0xff]
    %v426 = vld [vmem:[#allocation8 + $0x370] sm:$0xff]
    %v427 = vld [vmem:[#allocation8 + $0x378] sm:$0xff]
    %v428 = vld [vmem:[#allocation8 + $0x380] sm:$0xff]
    %v429 = vld [vmem:[#allocation8 + $0x388] sm:$0xff]
    %v430 = vld [vmem:[#allocation8 + $0x390] sm:$0xff]
    %v431 = vld [vmem:[#allocation8 + $0x398] sm:$0xff]
    %v432 = vld [vmem:[#allocation8 + $0x3a0] sm:$0xff]
    %v433 = vld [vmem:[#allocation8 + $0x3a8] sm:$0xff]
    %v434 = vld [vmem:[#allocation8 + $0x3b0] sm:$0xff]
    %v435 = vld [vmem:[#allocation8 + $0x3b8] sm:$0xff]
    %v436 = vld [vmem:[#allocation8 + $0x3c0] sm:$0xff]
    %v437 = vld [vmem:[#allocation8 + $0x3c8] sm:$0xff]
    %v438 = vld [vmem:[#allocation8 + $0x3d0] sm:$0xff]
    %v439 = vld [vmem:[#allocation8 + $0x3d8] sm:$0xff]
    %v440 = vld [vmem:[#allocation8 + $0x3e0] sm:$0xff]
    %v441 = vld [vmem:[#allocation8 + $0x3e8] sm:$0xff]
    %v442 = vld [vmem:[#allocation8 + $0x3f0] sm:$0xff]
    %v443 = vld [vmem:[#allocation8 + $0x3f8] sm:$0xff]
    %v444 = vld [vmem:[#allocation8 + $0x400] sm:$0xff]
    %v445 = vld [vmem:[#allocation8 + $0x408] sm:$0xff]
    %v446 = vld [vmem:[#allocation8 + $0x410] sm:$0xff]
    %v447 = vld [vmem:[#allocation8 + $0x418] sm:$0xff]
    %v448 = vld [vmem:[#allocation8 + $0x420] sm:$0xff]
    %v449 = vld [vmem:[#allocation8 + $0x428] sm:$0xff]
    %v450 = vld [vmem:[#allocation8 + $0x430] sm:$0xff]
    %v451 = vld [vmem:[#allocation8 + $0x438] sm:$0xff]
    %v452 = vld [vmem:[#allocation8 + $0x440] sm:$0xff]
    %v453 = vld [vmem:[#allocation8 + $0x448] sm:$0xff]
    %v454 = vld [vmem:[#allocation8 + $0x450] sm:$0xff]
    %v455 = vld [vmem:[#allocation8 + $0x458] sm:$0xff]
    %v456 = vld [vmem:[#allocation8 + $0x460] sm:$0xff]
    %v457 = vld [vmem:[#allocation8 + $0x468] sm:$0xff]
    %v458 = vld [vmem:[#allocation8 + $0x470] sm:$0xff]
    %v459 = vld [vmem:[#allocation8 + $0x478] sm:$0xff]
    %v460 = vld [vmem:[#allocation8 + $0x480] sm:$0xff]
    %v461 = vld [vmem:[#allocation8 + $0x488] sm:$0xff]
    %v462 = vld [vmem:[#allocation8 + $0x490] sm:$0xff]
    %v463 = vld [vmem:[#allocation8 + $0x498] sm:$0xff]
    %v464 = vld [vmem:[#allocation8 + $0x4a0] sm:$0xff]
    %v465 = vld [vmem:[#allocation8 + $0x4a8] sm:$0xff]
    %v466 = vld [vmem:[#allocation8 + $0x4b0] sm:$0xff]
    %v467 = vld [vmem:[#allocation8 + $0x4b8] sm:$0xff]
    %v468 = vld [vmem:[#allocation8 + $0x4c0] sm:$0xff]
    %v469 = vld [vmem:[#allocation8 + $0x4c8] sm:$0xff]
    %v470 = vld [vmem:[#allocation8 + $0x4d0] sm:$0xff]
    %v471 = vld [vmem:[#allocation8 + $0x4d8] sm:$0xff]
    %v472 = vld [vmem:[#allocation8 + $0x4e0] sm:$0xff]
    %v473 = vld [vmem:[#allocation8 + $0x4e8] sm:$0xff]
    %v474 = vld [vmem:[#allocation8 + $0x4f0] sm:$0xff]
    %v475 = vld [vmem:[#allocation8 + $0x4f8] sm:$0xff]
    %v476 = vld [vmem:[#allocation8 + $0x500] sm:$0xff]
    %v477 = vld [vmem:[#allocation8 + $0x508] sm:$0xff]
    %v478 = vld [vmem:[#allocation8 + $0x510] sm:$0xff]
    %v479 = vld [vmem:[#allocation8 + $0x518] sm:$0xff]
    %v480 = vld [vmem:[#allocation8 + $0x520] sm:$0xff]
    %v481 = vld [vmem:[#allocation8 + $0x528] sm:$0xff]
    %v482 = vld [vmem:[#allocation8 + $0x530] sm:$0xff]
    %v483 = vld [vmem:[#allocation8 + $0x538] sm:$0xff]
    %v484 = vld [vmem:[#allocation8 + $0x540] sm:$0xff]
    %v485 = vld [vmem:[#allocation8 + $0x548] sm:$0xff]
    %v486 = vld [vmem:[#allocation8 + $0x550] sm:$0xff]
    %v487 = vld [vmem:[#allocation8 + $0x558] sm:$0xff]
    %v488 = vld [vmem:[#allocation8 + $0x560] sm:$0xff]
    %v489 = vld [vmem:[#allocation8 + $0x568] sm:$0xff]
    %v490 = vld [vmem:[#allocation8 + $0x570] sm:$0xff]
    %v491 = vld [vmem:[#allocation8 + $0x578] sm:$0xff]
    %v492 = vld [vmem:[#allocation8 + $0x580] sm:$0xff]
    %v493 = vld [vmem:[#allocation8 + $0x588] sm:$0xff]
    %v494 = vld [vmem:[#allocation8 + $0x590] sm:$0xff]
    %v495 = vld [vmem:[#allocation8 + $0x598] sm:$0xff]
    %v496 = vld [vmem:[#allocation8 + $0x5a0] sm:$0xff]
    %v497 = vld [vmem:[#allocation8 + $0x5a8] sm:$0xff]
    %v498 = vld [vmem:[#allocation8 + $0x5b0] sm:$0xff]
    %v499 = vld [vmem:[#allocation8 + $0x5b8] sm:$0xff]
    %v500 = vld [vmem:[#allocation8 + $0x5c0] sm:$0xff]
    %v501 = vld [vmem:[#allocation8 + $0x5c8] sm:$0xff]
    %v502 = vld [vmem:[#allocation8 + $0x5d0] sm:$0xff]
    %v503 = vld [vmem:[#allocation8 + $0x5d8] sm:$0xff]
    %v504 = vld [vmem:[#allocation8 + $0x5e0] sm:$0xff]
    %v505 = vld [vmem:[#allocation8 + $0x5e8] sm:$0xff]
    %v506 = vld [vmem:[#allocation8 + $0x5f0] sm:$0xff]
    %v507 = vld [vmem:[#allocation8 + $0x5f8] sm:$0xff]
    %v508 = vld [vmem:[#allocation8 + $0x600] sm:$0xff]
    %v509 = vld [vmem:[#allocation8 + $0x608] sm:$0xff]
    %v510 = vld [vmem:[#allocation8 + $0x610] sm:$0xff]
    %v511 = vld [vmem:[#allocation8 + $0x618] sm:$0xff]
    %v512 = vld [vmem:[#allocation8 + $0x620] sm:$0xff]
    %v513 = vld [vmem:[#allocation8 + $0x628] sm:$0xff]
    %v514 = vld [vmem:[#allocation8 + $0x630] sm:$0xff]
    %v515 = vld [vmem:[#allocation8 + $0x638] sm:$0xff]
    %v516 = vld [vmem:[#allocation8 + $0x640] sm:$0xff]
    %v517 = vld [vmem:[#allocation8 + $0x648] sm:$0xff]
    %v518 = vld [vmem:[#allocation8 + $0x650] sm:$0xff]
    %v519 = vld [vmem:[#allocation8 + $0x658] sm:$0xff]
    %v520 = vld [vmem:[#allocation8 + $0x660] sm:$0xff]
    %v521 = vld [vmem:[#allocation8 + $0x668] sm:$0xff]
    %v522 = vld [vmem:[#allocation8 + $0x670] sm:$0xff]
    %v523 = vld [vmem:[#allocation8 + $0x678] sm:$0xff]
    %v524 = vld [vmem:[#allocation8 + $0x680] sm:$0xff]
    %v525 = vld [vmem:[#allocation8 + $0x688] sm:$0xff]
    %v526 = vld [vmem:[#allocation8 + $0x690] sm:$0xff]
    %v527 = vld [vmem:[#allocation8 + $0x698] sm:$0xff]
    %v528 = vld [vmem:[#allocation8 + $0x6a0] sm:$0xff]
    %v529 = vld [vmem:[#allocation8 + $0x6a8] sm:$0xff]
    %v530 = vld [vmem:[#allocation8 + $0x6b0] sm:$0xff]
    %v531 = vld [vmem:[#allocation8 + $0x6b8] sm:$0xff]
    %v532 = vld [vmem:[#allocation8 + $0x6c0] sm:$0xff]
    %v533 = vld [vmem:[#allocation8 + $0x6c8] sm:$0xff]
    %v534 = vld [vmem:[#allocation8 + $0x6d0] sm:$0xff]
    %v535 = vld [vmem:[#allocation8 + $0x6d8] sm:$0xff]
    %v536 = vld [vmem:[#allocation8 + $0x6e0] sm:$0xff]
    %v537 = vld [vmem:[#allocation8 + $0x6e8] sm:$0xff]
    %v538 = vld [vmem:[#allocation8 + $0x6f0] sm:$0xff]
    %v539 = vld [vmem:[#allocation8 + $0x6f8] sm:$0xff]
    %v540 = vld [vmem:[#allocation8 + $0x700] sm:$0xff]
    %v541 = vld [vmem:[#allocation8 + $0x708] sm:$0xff]
    %v542 = vld [vmem:[#allocation8 + $0x710] sm:$0xff]
    %v543 = vld [vmem:[#allocation8 + $0x718] sm:$0xff]
    %v544 = vld [vmem:[#allocation8 + $0x720] sm:$0xff]
    %v545 = vld [vmem:[#allocation8 + $0x728] sm:$0xff]
    %v546 = vld [vmem:[#allocation8 + $0x730] sm:$0xff]
    %v547 = vld [vmem:[#allocation8 + $0x738] sm:$0xff]
    %v548 = vld [vmem:[#allocation8 + $0x740] sm:$0xff]
    %v549 = vld [vmem:[#allocation8 + $0x748] sm:$0xff]
    %v550 = vld [vmem:[#allocation8 + $0x750] sm:$0xff]
    %v551 = vld [vmem:[#allocation8 + $0x758] sm:$0xff]
    %v552 = vld [vmem:[#allocation8 + $0x760] sm:$0xff]
    %v553 = vld [vmem:[#allocation8 + $0x768] sm:$0xff]
    %v554 = vld [vmem:[#allocation8 + $0x770] sm:$0xff]
    %v555 = vld [vmem:[#allocation8 + $0x778] sm:$0xff]
    %v556 = vld [vmem:[#allocation8 + $0x780] sm:$0xff]
    %v557 = vld [vmem:[#allocation8 + $0x788] sm:$0xff]
    %v558 = vld [vmem:[#allocation8 + $0x790] sm:$0xff]
    %v559 = vld [vmem:[#allocation8 + $0x798] sm:$0xff]
    %v560 = vld [vmem:[#allocation8 + $0x7a0] sm:$0xff]
    %v561 = vld [vmem:[#allocation8 + $0x7a8] sm:$0xff]
    %v562 = vld [vmem:[#allocation8 + $0x7b0] sm:$0xff]
    %v563 = vld [vmem:[#allocation8 + $0x7b8] sm:$0xff]
    %v564 = vld [vmem:[#allocation8 + $0x7c0] sm:$0xff]
    %v565 = vld [vmem:[#allocation8 + $0x7c8] sm:$0xff]
    %v566 = vld [vmem:[#allocation8 + $0x7d0] sm:$0xff]
    %v567 = vld [vmem:[#allocation8 + $0x7d8] sm:$0xff]
    %v568 = vld [vmem:[#allocation8 + $0x7e0] sm:$0xff]
    %v569 = vld [vmem:[#allocation8 + $0x7e8] sm:$0xff]
    %v570 = vld [vmem:[#allocation8 + $0x7f0] sm:$0xff]
    %v571 = vld [vmem:[#allocation8 + $0x7f8] sm:$0xff]
    %v572 = vld [vmem:[#allocation8 + $0x800] sm:$0xff]
    %v573 = vld [vmem:[#allocation8 + $0x808] sm:$0xff]
    %v574 = vld [vmem:[#allocation8 + $0x810] sm:$0xff]
    %v575 = vld [vmem:[#allocation8 + $0x818] sm:$0xff]
    %v576 = vld [vmem:[#allocation8 + $0x820] sm:$0xff]
    %v577 = vld [vmem:[#allocation8 + $0x828] sm:$0xff]
    %v578 = vld [vmem:[#allocation8 + $0x830] sm:$0xff]
    %v579 = vld [vmem:[#allocation8 + $0x838] sm:$0xff]
    %v580 = vld [vmem:[#allocation8 + $0x840] sm:$0xff]
    %v581 = vld [vmem:[#allocation8 + $0x848] sm:$0xff]
    %v582 = vld [vmem:[#allocation8 + $0x850] sm:$0xff]
    %v583 = vld [vmem:[#allocation8 + $0x858] sm:$0xff]
    %v584 = vld [vmem:[#allocation8 + $0x860] sm:$0xff]
    %v585 = vld [vmem:[#allocation8 + $0x868] sm:$0xff]
    %v586 = vld [vmem:[#allocation8 + $0x870] sm:$0xff]
    %v587 = vld [vmem:[#allocation8 + $0x878] sm:$0xff]
    %v588 = vld [vmem:[#allocation8 + $0x880] sm:$0xff]
    %v589 = vld [vmem:[#allocation8 + $0x888] sm:$0xff]
    %v590 = vld [vmem:[#allocation8 + $0x890] sm:$0xff]
    %v591 = vld [vmem:[#allocation8 + $0x898] sm:$0xff]
    %v592 = vld [vmem:[#allocation8 + $0x8a0] sm:$0xff]
    %v593 = vld [vmem:[#allocation8 + $0x8a8] sm:$0xff]
    %v594 = vld [vmem:[#allocation8 + $0x8b0] sm:$0xff]
    %v595 = vld [vmem:[#allocation8 + $0x8b8] sm:$0xff]
    %v596 = vld [vmem:[#allocation8 + $0x8c0] sm:$0xff]
    %v597 = vld [vmem:[#allocation8 + $0x8c8] sm:$0xff]
    %v598 = vld [vmem:[#allocation8 + $0x8d0] sm:$0xff]
    %v599 = vld [vmem:[#allocation8 + $0x8d8] sm:$0xff]
    %v600 = vld [vmem:[#allocation8 + $0x8e0] sm:$0xff]
    %v601 = vld [vmem:[#allocation8 + $0x8e8] sm:$0xff]
    %v602 = vld [vmem:[#allocation8 + $0x8f0] sm:$0xff]
    %v603 = vld [vmem:[#allocation8 + $0x8f8] sm:$0xff]
    %v604 = vld [vmem:[#allocation8 + $0x900] sm:$0xff]
    %v605 = vld [vmem:[#allocation8 + $0x908] sm:$0xff]
    %v606 = vld [vmem:[#allocation8 + $0x910] sm:$0xff]
    %v607 = vld [vmem:[#allocation8 + $0x918] sm:$0xff]
    %v608 = vld [vmem:[#allocation8 + $0x920] sm:$0xff]
    %v609 = vld [vmem:[#allocation8 + $0x928] sm:$0xff]
    %v610 = vld [vmem:[#allocation8 + $0x930] sm:$0xff]
    %v611 = vld [vmem:[#allocation8 + $0x938] sm:$0xff]
    %v612 = vld [vmem:[#allocation8 + $0x940] sm:$0xff]
    %v613 = vld [vmem:[#allocation8 + $0x948] sm:$0xff]
    %v614 = vld [vmem:[#allocation8 + $0x950] sm:$0xff]
    %v615 = vld [vmem:[#allocation8 + $0x958] sm:$0xff]
    %v616 = vld [vmem:[#allocation8 + $0x960] sm:$0xff]
    %v617 = vld [vmem:[#allocation8 + $0x968] sm:$0xff]
    %v618 = vld [vmem:[#allocation8 + $0x970] sm:$0xff]
    %v619 = vld [vmem:[#allocation8 + $0x978] sm:$0xff]
    %v620 = vld [vmem:[#allocation8 + $0x980] sm:$0xff]
    %v621 = vld [vmem:[#allocation8 + $0x988] sm:$0xff]
    %v622 = vld [vmem:[#allocation8 + $0x990] sm:$0xff]
    %v623 = vld [vmem:[#allocation8 + $0x998] sm:$0xff]
    %v624 = vld [vmem:[#allocation8 + $0x9a0] sm:$0xff]
    %v625 = vld [vmem:[#allocation8 + $0x9a8] sm:$0xff]
    %v626 = vld [vmem:[#allocation8 + $0x9b0] sm:$0xff]
    %v627 = vld [vmem:[#allocation8 + $0x9b8] sm:$0xff]
    %v628 = vld [vmem:[#allocation8 + $0x9c0] sm:$0xff]
    %v629 = vld [vmem:[#allocation8 + $0x9c8] sm:$0xff]
    %v630 = vld [vmem:[#allocation8 + $0x9d0] sm:$0xff]
    %v631 = vld [vmem:[#allocation8 + $0x9d8] sm:$0xff]
    %v632 = vld [vmem:[#allocation8 + $0x9e0] sm:$0xff]
    %v633 = vld [vmem:[#allocation8 + $0x9e8] sm:$0xff]
    %v634 = vld [vmem:[#allocation8 + $0x9f0] sm:$0xff]
    %v635 = vld [vmem:[#allocation8 + $0x9f8] sm:$0xff]
    %v636 = vld [vmem:[#allocation8 + $0xa00] sm:$0xff]
    %v637 = vld [vmem:[#allocation8 + $0xa08] sm:$0xff]
    %v638 = vld [vmem:[#allocation8 + $0xa10] sm:$0xff]
    %v639 = vld [vmem:[#allocation8 + $0xa18] sm:$0xff]
    %v640 = vld [vmem:[#allocation8 + $0xa20] sm:$0xff]
    %v641 = vld [vmem:[#allocation8 + $0xa28] sm:$0xff]
    %v642 = vld [vmem:[#allocation8 + $0xa30] sm:$0xff]
    %v643 = vld [vmem:[#allocation8 + $0xa38] sm:$0xff]
    %v644 = vld [vmem:[#allocation8 + $0xa40] sm:$0xff]
    %v645 = vld [vmem:[#allocation8 + $0xa48] sm:$0xff]
    %v646 = vld [vmem:[#allocation8 + $0xa50] sm:$0xff]
    %v647 = vld [vmem:[#allocation8 + $0xa58] sm:$0xff]
    %v648 = vld [vmem:[#allocation8 + $0xa60] sm:$0xff]
    %v649 = vld [vmem:[#allocation8 + $0xa68] sm:$0xff]
    %v650 = vld [vmem:[#allocation8 + $0xa70] sm:$0xff]
    %v651 = vld [vmem:[#allocation8 + $0xa78] sm:$0xff]
    %v652 = vld [vmem:[#allocation8 + $0xa80] sm:$0xff]
    %v653 = vld [vmem:[#allocation8 + $0xa88] sm:$0xff]
    %v654 = vld [vmem:[#allocation8 + $0xa90] sm:$0xff]
    %v655 = vld [vmem:[#allocation8 + $0xa98] sm:$0xff]
    %v656 = vld [vmem:[#allocation8 + $0xaa0] sm:$0xff]
    %v657 = vld [vmem:[#allocation8 + $0xaa8] sm:$0xff]
    %v658 = vld [vmem:[#allocation8 + $0xab0] sm:$0xff]
    %v659 = vld [vmem:[#allocation8 + $0xab8] sm:$0xff]
    %v660 = vld [vmem:[#allocation8 + $0xac0] sm:$0xff]
    %v661 = vld [vmem:[#allocation8 + $0xac8] sm:$0xff]
    %v662 = vld [vmem:[#allocation8 + $0xad0] sm:$0xff]
    %v663 = vld [vmem:[#allocation8 + $0xad8] sm:$0xff]
    %v664 = vld [vmem:[#allocation8 + $0xae0] sm:$0xff]
    %v665 = vld [vmem:[#allocation8 + $0xae8] sm:$0xff]
    %v666 = vld [vmem:[#allocation8 + $0xaf0] sm:$0xff]
    %v667 = vld [vmem:[#allocation8 + $0xaf8] sm:$0xff]
    %v668 = vld [vmem:[#allocation8 + $0xb00] sm:$0xff]
    %v669 = vld [vmem:[#allocation8 + $0xb08] sm:$0xff]
    %v670 = vld [vmem:[#allocation8 + $0xb10] sm:$0xff]
    %v671 = vld [vmem:[#allocation8 + $0xb18] sm:$0xff]
    %v672 = vld [vmem:[#allocation8 + $0xb20] sm:$0xff]
    %v673 = vld [vmem:[#allocation8 + $0xb28] sm:$0xff]
    %v674 = vld [vmem:[#allocation8 + $0xb30] sm:$0xff]
    %v675 = vld [vmem:[#allocation8 + $0xb38] sm:$0xff]
    %v676 = vld [vmem:[#allocation8 + $0xb40] sm:$0xff]
    %v677 = vld [vmem:[#allocation8 + $0xb48] sm:$0xff]
    %v678 = vld [vmem:[#allocation8 + $0xb50] sm:$0xff]
    %v679 = vld [vmem:[#allocation8 + $0xb58] sm:$0xff]
    %v680 = vld [vmem:[#allocation8 + $0xb60] sm:$0xff]
    %v681 = vld [vmem:[#allocation8 + $0xb68] sm:$0xff]
    %v682 = vld [vmem:[#allocation8 + $0xb70] sm:$0xff]
    %v683 = vld [vmem:[#allocation8 + $0xb78] sm:$0xff]
    %v684 = vld [vmem:[#allocation8 + $0xb80] sm:$0xff]
    %v685 = vld [vmem:[#allocation8 + $0xb88] sm:$0xff]
    %v686 = vld [vmem:[#allocation8 + $0xb90] sm:$0xff]
    %v687 = vld [vmem:[#allocation8 + $0xb98] sm:$0xff]
    %v688 = vld [vmem:[#allocation8 + $0xba0] sm:$0xff]
    %v689 = vld [vmem:[#allocation8 + $0xba8] sm:$0xff]
    %v690 = vld [vmem:[#allocation8 + $0xbb0] sm:$0xff]
    %v691 = vld [vmem:[#allocation8 + $0xbb8] sm:$0xff]
    %v692 = vld [vmem:[#allocation8 + $0xbc0] sm:$0xff]
    %v693 = vld [vmem:[#allocation8 + $0xbc8] sm:$0xff]
    %v694 = vld [vmem:[#allocation8 + $0xbd0] sm:$0xff]
    %v695 = vld [vmem:[#allocation8 + $0xbd8] sm:$0xff]
    %v696 = vld [vmem:[#allocation8 + $0xbe0] sm:$0xff]
    %v697 = vld [vmem:[#allocation8 + $0xbe8] sm:$0xff]
    %v698 = vld [vmem:[#allocation8 + $0xbf0] sm:$0xff]
    %v699 = vld [vmem:[#allocation8 + $0xbf8] sm:$0xff]
    %v700 = vld [vmem:[#allocation8 + $0xc00] sm:$0xff]
    %v701 = vld [vmem:[#allocation8 + $0xc08] sm:$0xff]
    %v702 = vld [vmem:[#allocation8 + $0xc10] sm:$0xff]
    %v703 = vld [vmem:[#allocation8 + $0xc18] sm:$0xff]
    %v704 = vld [vmem:[#allocation8 + $0xc20] sm:$0xff]
    %v705 = vld [vmem:[#allocation8 + $0xc28] sm:$0xff]
    %v706 = vld [vmem:[#allocation8 + $0xc30] sm:$0xff]
    %v707 = vld [vmem:[#allocation8 + $0xc38] sm:$0xff]
    %v708 = vld [vmem:[#allocation8 + $0xc40] sm:$0xff]
    %v709 = vld [vmem:[#allocation8 + $0xc48] sm:$0xff]
    %v710 = vld [vmem:[#allocation8 + $0xc50] sm:$0xff]
    %v711 = vld [vmem:[#allocation8 + $0xc58] sm:$0xff]
    %v712 = vld [vmem:[#allocation8 + $0xc60] sm:$0xff]
    %v713 = vld [vmem:[#allocation8 + $0xc68] sm:$0xff]
    %v714 = vld [vmem:[#allocation8 + $0xc70] sm:$0xff]
    %v715 = vld [vmem:[#allocation8 + $0xc78] sm:$0xff]
    %v716 = vld [vmem:[#allocation8 + $0xc80] sm:$0xff]
    %v717 = vld [vmem:[#allocation8 + $0xc88] sm:$0xff]
    %v718 = vld [vmem:[#allocation8 + $0xc90] sm:$0xff]
    %v719 = vld [vmem:[#allocation8 + $0xc98] sm:$0xff]
    %v720 = vld [vmem:[#allocation8 + $0xca0] sm:$0xff]
    %v721 = vld [vmem:[#allocation8 + $0xca8] sm:$0xff]
    %v722 = vld [vmem:[#allocation8 + $0xcb0] sm:$0xff]
    %v723 = vld [vmem:[#allocation8 + $0xcb8] sm:$0xff]
    %v724 = vld [vmem:[#allocation8 + $0xcc0] sm:$0xff]
    %v725 = vld [vmem:[#allocation8 + $0xcc8] sm:$0xff]
    %v726 = vld [vmem:[#allocation8 + $0xcd0] sm:$0xff]
    %v727 = vld [vmem:[#allocation8 + $0xcd8] sm:$0xff]
    %v728 = vld [vmem:[#allocation8 + $0xce0] sm:$0xff]
    %v729 = vld [vmem:[#allocation8 + $0xce8] sm:$0xff]
    %v730 = vld [vmem:[#allocation8 + $0xcf0] sm:$0xff]
    %v731 = vld [vmem:[#allocation8 + $0xcf8] sm:$0xff]
    %v732 = vld [vmem:[#allocation8 + $0xd00] sm:$0xff]
    %v733 = vld [vmem:[#allocation8 + $0xd08] sm:$0xff]
    %v734 = vld [vmem:[#allocation8 + $0xd10] sm:$0xff]
    %v735 = vld [vmem:[#allocation8 + $0xd18] sm:$0xff]
    %v736 = vld [vmem:[#allocation8 + $0xd20] sm:$0xff]
    %v737 = vld [vmem:[#allocation8 + $0xd28] sm:$0xff]
    %v738 = vld [vmem:[#allocation8 + $0xd30] sm:$0xff]
    %v739 = vld [vmem:[#allocation8 + $0xd38] sm:$0xff]
    %v740 = vld [vmem:[#allocation8 + $0xd40] sm:$0xff]
    %v741 = vld [vmem:[#allocation8 + $0xd48] sm:$0xff]
    %v742 = vld [vmem:[#allocation8 + $0xd50] sm:$0xff]
    %v743 = vld [vmem:[#allocation8 + $0xd58] sm:$0xff]
    %v744 = vld [vmem:[#allocation8 + $0xd60] sm:$0xff]
    %v745 = vld [vmem:[#allocation8 + $0xd68] sm:$0xff]
    %v746 = vld [vmem:[#allocation8 + $0xd70] sm:$0xff]
    %v747 = vld [vmem:[#allocation8 + $0xd78] sm:$0xff]
    %v748 = vld [vmem:[#allocation8 + $0xd80] sm:$0xff]
    %v749 = vld [vmem:[#allocation8 + $0xd88] sm:$0xff]
    %v750 = vld [vmem:[#allocation8 + $0xd90] sm:$0xff]
    %v751 = vld [vmem:[#allocation8 + $0xd98] sm:$0xff]
    %v752 = vld [vmem:[#allocation8 + $0xda0] sm:$0xff]
    %v753 = vld [vmem:[#allocation8 + $0xda8] sm:$0xff]
    %v754 = vld [vmem:[#allocation8 + $0xdb0] sm:$0xff]
    %v755 = vld [vmem:[#allocation8 + $0xdb8] sm:$0xff]
    %v756 = vld [vmem:[#allocation8 + $0xdc0] sm:$0xff]
    %v757 = vld [vmem:[#allocation8 + $0xdc8] sm:$0xff]
    %v758 = vld [vmem:[#allocation8 + $0xdd0] sm:$0xff]
    %v759 = vld [vmem:[#allocation8 + $0xdd8] sm:$0xff]
    %v760 = vld [vmem:[#allocation8 + $0xde0] sm:$0xff]
    %v761 = vld [vmem:[#allocation8 + $0xde8] sm:$0xff]
    %v762 = vld [vmem:[#allocation8 + $0xdf0] sm:$0xff]
    %v763 = vld [vmem:[#allocation8 + $0xdf8] sm:$0xff]
    %v764 = vld [vmem:[#allocation8 + $0xe00] sm:$0xff]
    %v765 = vld [vmem:[#allocation8 + $0xe08] sm:$0xff]
    %v766 = vld [vmem:[#allocation8 + $0xe10] sm:$0xff]
    %v767 = vld [vmem:[#allocation8 + $0xe18] sm:$0xff]
    %v768 = vld [vmem:[#allocation8 + $0xe20] sm:$0xff]
    %v769 = vld [vmem:[#allocation8 + $0xe28] sm:$0xff]
    %v770 = vld [vmem:[#allocation8 + $0xe30] sm:$0xff]
    %v771 = vld [vmem:[#allocation8 + $0xe38] sm:$0xff]
    %v772 = vld [vmem:[#allocation8 + $0xe40] sm:$0xff]
    %v773 = vld [vmem:[#allocation8 + $0xe48] sm:$0xff]
    %v774 = vld [vmem:[#allocation8 + $0xe50] sm:$0xff]
    %v775 = vld [vmem:[#allocation8 + $0xe58] sm:$0xff]
    %v776 = vld [vmem:[#allocation8 + $0xe60] sm:$0xff]
    %v777 = vld [vmem:[#allocation8 + $0xe68] sm:$0xff]
    %v778 = vld [vmem:[#allocation8 + $0xe70] sm:$0xff]
    %v779 = vld [vmem:[#allocation8 + $0xe78] sm:$0xff]
    %v780 = vld [vmem:[#allocation8 + $0xe80] sm:$0xff]
    %v781 = vld [vmem:[#allocation8 + $0xe88] sm:$0xff]
    %v782 = vld [vmem:[#allocation8 + $0xe90] sm:$0xff]
    %v783 = vld [vmem:[#allocation8 + $0xe98] sm:$0xff]
    %v784 = vld [vmem:[#allocation8 + $0xea0] sm:$0xff]
    %v785 = vld [vmem:[#allocation8 + $0xea8] sm:$0xff]
    %v786 = vld [vmem:[#allocation8 + $0xeb0] sm:$0xff]
    %v787 = vld [vmem:[#allocation8 + $0xeb8] sm:$0xff]
    %v788 = vld [vmem:[#allocation8 + $0xec0] sm:$0xff]
    %v789 = vld [vmem:[#allocation8 + $0xec8] sm:$0xff]
    %v790 = vld [vmem:[#allocation8 + $0xed0] sm:$0xff]
    %v791 = vld [vmem:[#allocation8 + $0xed8] sm:$0xff]
    %v792 = vld [vmem:[#allocation8 + $0xee0] sm:$0xff]
    %v793 = vld [vmem:[#allocation8 + $0xee8] sm:$0xff]
    %v794 = vld [vmem:[#allocation8 + $0xef0] sm:$0xff]
    %v795 = vld [vmem:[#allocation8 + $0xef8] sm:$0xff]
    %v796 = vld [vmem:[#allocation8 + $0xf00] sm:$0xff]
    %v797 = vld [vmem:[#allocation8 + $0xf08] sm:$0xff]
    %v798 = vld [vmem:[#allocation8 + $0xf10] sm:$0xff]
    %v799 = vld [vmem:[#allocation8 + $0xf18] sm:$0xff]
    %v800 = vld [vmem:[#allocation8 + $0xf20] sm:$0xff]
    %v801 = vld [vmem:[#allocation8 + $0xf28] sm:$0xff]
    %v802 = vld [vmem:[#allocation8 + $0xf30] sm:$0xff]
    %v803 = vld [vmem:[#allocation8 + $0xf38] sm:$0xff]
    %v804 = vld [vmem:[#allocation8 + $0xf40] sm:$0xff]
    %v805 = vld [vmem:[#allocation8 + $0xf48] sm:$0xff]
    %v806 = vld [vmem:[#allocation8 + $0xf50] sm:$0xff]
    %v807 = vld [vmem:[#allocation8 + $0xf58] sm:$0xff]
    %v808 = vld [vmem:[#allocation8 + $0xf60] sm:$0xff]
    %v809 = vld [vmem:[#allocation8 + $0xf68] sm:$0xff]
    %v810 = vld [vmem:[#allocation8 + $0xf70] sm:$0xff]
    %v811 = vld [vmem:[#allocation8 + $0xf78] sm:$0xff]
    %v812 = vld [vmem:[#allocation8 + $0xf80] sm:$0xff]
    %v813 = vld [vmem:[#allocation8 + $0xf88] sm:$0xff]
    %v814 = vld [vmem:[#allocation8 + $0xf90] sm:$0xff]
    %v815 = vld [vmem:[#allocation8 + $0xf98] sm:$0xff]
    %v816 = vld [vmem:[#allocation8 + $0xfa0] sm:$0xff]
    %v817 = vld [vmem:[#allocation8 + $0xfa8] sm:$0xff]
    %v818 = vld [vmem:[#allocation8 + $0xfb0] sm:$0xff]
    %v819 = vld [vmem:[#allocation8 + $0xfb8] sm:$0xff]
    %v820 = vld [vmem:[#allocation8 + $0xfc0] sm:$0xff]
    %v821 = vld [vmem:[#allocation8 + $0xfc8] sm:$0xff]
    %v822 = vld [vmem:[#allocation8 + $0xfd0] sm:$0xff]
    %v823 = vld [vmem:[#allocation8 + $0xfd8] sm:$0xff]
    %v824 = vld [vmem:[#allocation8 + $0xfe0] sm:$0xff]
    %v825 = vld [vmem:[#allocation8 + $0xfe8] sm:$0xff]
    %v826 = vld [vmem:[#allocation8 + $0xff0] sm:$0xff]
    %v827 = vld [vmem:[#allocation8 + $0xff8] sm:$0xff]
    %v828 = vld [vmem:[#allocation10] sm:$0xff]
    %v830 = vlaneseq
    %v831 = vshrl.u32 %v830, 7
    %v832 = vsub.s32 0, %v831
    %v833 = vrot.slane %v828, %v832
    %v834 = vlaneseq
    %v835 = vshrl.u32 %v834, 7
    %v836 = vsub.s32 1, %v835
    %v837 = vrot.slane %v828, %v836
    %v838 = vlaneseq
    %v839 = vshrl.u32 %v838, 7
    %v840 = vsub.s32 2, %v839
    %v841 = vrot.slane %v828, %v840
    %v842 = vlaneseq
    %v843 = vshrl.u32 %v842, 7
    %v844 = vsub.s32 3, %v843
    %v845 = vrot.slane %v828, %v844
    %v846 = vlaneseq
    %v847 = vshrl.u32 %v846, 7
    %v848 = vsub.s32 4, %v847
    %v849 = vrot.slane %v828, %v848
    %v850 = vlaneseq
    %v851 = vshrl.u32 %v850, 7
    %v852 = vsub.s32 5, %v851
    %v853 = vrot.slane %v828, %v852
    %v854 = vlaneseq
    %v855 = vshrl.u32 %v854, 7
    %v856 = vsub.s32 6, %v855
    %v857 = vrot.slane %v828, %v856
    %v858 = vlaneseq
    %v859 = vshrl.u32 %v858, 7
    %v860 = vsub.s32 7, %v859
    %v861 = vrot.slane %v828, %v860
    %870 = vmatprep.subr.mxu0 %v437
    %871 = vmatpush1.msra.mxu0 %v436
    %872 = vmatprep.subr.mxu0 %v429
    %873 = vmatpush1.msra.mxu0 %v428
    %874 = vmatprep.subr.mxu0 %v421
    %875 = vmatpush1.msra.mxu0 %v420
    %876 = vmatprep.subr.mxu0 %v413
    %877 = vmatpush1.msra.mxu0 %v412
    %878 = vmatprep.subr.mxu0 %v405
    %879 = vmatpush1.msra.mxu0 %v404
    %880 = vmatprep.subr.mxu0 %v397
    %881 = vmatpush1.msra.mxu0 %v396
    %882 = vmatprep.subr.mxu0 %v389
    %883 = vmatpush1.msra.mxu0 %v388
    %884 = vmatprep.subr.mxu0 %v381
    %885 = vmatpush1.msra.mxu0 %v380
    %886 = vmatprep.subr.mxu0 %v373
    %887 = vmatpush1.msra.mxu0 %v372
    %888 = vmatprep.subr.mxu0 %v365
    %889 = vmatpush1.msra.mxu0 %v364
    %890 = vmatprep.subr.mxu0 %v357
    %891 = vmatpush1.msra.mxu0 %v356
    %892 = vmatprep.subr.mxu0 %v349
    %893 = vmatpush1.msra.mxu0 %v348
    %894 = vmatprep.subr.mxu0 %v341
    %895 = vmatpush1.msra.mxu0 %v340
    %896 = vmatprep.subr.mxu0 %v333
    %897 = vmatpush1.msra.mxu0 %v332
    %898 = vmatprep.subr.mxu0 %v325
    %899 = vmatpush1.msra.mxu0 %v324
    %900 = vmatprep.subr.mxu0 %v317
    %901 = vmatpush1.msra.mxu0 %v316
    %902 = vmatprep.subr.mxu0 %v565
    %903 = vmatpush2.msra.mxu0 %v564
    %904 = vmatprep.subr.mxu0 %v557
    %905 = vmatpush2.msra.mxu0 %v556
    %906 = vmatprep.subr.mxu0 %v549
    %907 = vmatpush2.msra.mxu0 %v548
    %908 = vmatprep.subr.mxu0 %v541
    %909 = vmatpush2.msra.mxu0 %v540
    %910 = vmatprep.subr.mxu0 %v533
    %911 = vmatpush2.msra.mxu0 %v532
    %912 = vmatprep.subr.mxu0 %v525
    %913 = vmatpush2.msra.mxu0 %v524
    %914 = vmatprep.subr.mxu0 %v517
    %915 = vmatpush2.msra.mxu0 %v516
    %916 = vmatprep.subr.mxu0 %v509
    %917 = vmatpush2.msra.mxu0 %v508
    %918 = vmatprep.subr.mxu0 %v501
    %919 = vmatpush2.msra.mxu0 %v500
    %920 = vmatprep.subr.mxu0 %v493
    %921 = vmatpush2.msra.mxu0 %v492
    %922 = vmatprep.subr.mxu0 %v485
    %923 = vmatpush2.msra.mxu0 %v484
    %924 = vmatprep.subr.mxu0 %v477
    %925 = vmatpush2.msra.mxu0 %v476
    %926 = vmatprep.subr.mxu0 %v469
    %927 = vmatpush2.msra.mxu0 %v468
    %928 = vmatprep.subr.mxu0 %v461
    %929 = vmatpush2.msra.mxu0 %v460
    %930 = vmatprep.subr.mxu0 %v453
    %931 = vmatpush2.msra.mxu0 %v452
    %932 = vmatprep.subr.mxu0 %v445
    %933 = vmatpush2.msra.mxu0 %v444
    %934 = vmatprep.mubr.f32.mxu0 %v313
    %935 = vmatmul.mubr.f32.gmra.mxu0 %v312
    %v936 = vpop.f32.mrf.mxu0
    %v937 = vadd.f32 %v833, %v936
    %v938 = vpop.f32.mrf.mxu0
    %v939 = vadd.f32 %v837, %v938
    %940 = vdwg.mxu0
    %941 = vmatprep.subr.mxu0 %v693
    %942 = vmatpush1.msra.mxu0 %v692
    %943 = vmatprep.subr.mxu0 %v685
    %944 = vmatpush1.msra.mxu0 %v684
    %945 = vmatprep.subr.mxu0 %v677
    %946 = vmatpush1.msra.mxu0 %v676
    %947 = vmatprep.subr.mxu0 %v669
    %948 = vmatpush1.msra.mxu0 %v668
    %949 = vmatprep.subr.mxu0 %v661
    %950 = vmatpush1.msra.mxu0 %v660
    %951 = vmatprep.subr.mxu0 %v653
    %952 = vmatpush1.msra.mxu0 %v652
    %953 = vmatprep.subr.mxu0 %v645
    %954 = vmatpush1.msra.mxu0 %v644
    %955 = vmatprep.subr.mxu0 %v637
    %956 = vmatpush1.msra.mxu0 %v636
    %957 = vmatprep.subr.mxu0 %v629
    %958 = vmatpush1.msra.mxu0 %v628
    %959 = vmatprep.subr.mxu0 %v621
    %960 = vmatpush1.msra.mxu0 %v620
    %961 = vmatprep.subr.mxu0 %v613
    %962 = vmatpush1.msra.mxu0 %v612
    %963 = vmatprep.subr.mxu0 %v605
    %964 = vmatpush1.msra.mxu0 %v604
    %965 = vmatprep.subr.mxu0 %v597
    %966 = vmatpush1.msra.mxu0 %v596
    %967 = vmatprep.subr.mxu0 %v589
    %968 = vmatpush1.msra.mxu0 %v588
    %969 = vmatprep.subr.mxu0 %v581
    %970 = vmatpush1.msra.mxu0 %v580
    %971 = vmatprep.subr.mxu0 %v573
    %972 = vmatpush1.msra.mxu0 %v572
    %973 = vmatprep.subr.mxu0 %v821
    %974 = vmatpush2.msra.mxu0 %v820
    %975 = vmatprep.subr.mxu0 %v813
    %976 = vmatpush2.msra.mxu0 %v812
    %977 = vmatprep.subr.mxu0 %v805
    %978 = vmatpush2.msra.mxu0 %v804
    %979 = vmatprep.subr.mxu0 %v797
    %980 = vmatpush2.msra.mxu0 %v796
    %981 = vmatprep.subr.mxu0 %v789
    %982 = vmatpush2.msra.mxu0 %v788
    %983 = vmatprep.subr.mxu0 %v781
    %984 = vmatpush2.msra.mxu0 %v780
    %985 = vmatprep.subr.mxu0 %v773
    %986 = vmatpush2.msra.mxu0 %v772
    %987 = vmatprep.subr.mxu0 %v765
    %988 = vmatpush2.msra.mxu0 %v764
    %989 = vmatprep.subr.mxu0 %v757
    %990 = vmatpush2.msra.mxu0 %v756
    %991 = vmatprep.subr.mxu0 %v749
    %992 = vmatpush2.msra.mxu0 %v748
    %993 = vmatprep.subr.mxu0 %v741
    %994 = vmatpush2.msra.mxu0 %v740
    %995 = vmatprep.subr.mxu0 %v733
    %996 = vmatpush2.msra.mxu0 %v732
    %997 = vmatprep.subr.mxu0 %v725
    %998 = vmatpush2.msra.mxu0 %v724
    %999 = vmatprep.subr.mxu0 %v717
    %1000 = vmatpush2.msra.mxu0 %v716
    %1001 = vmatprep.subr.mxu0 %v709
    %1002 = vmatpush2.msra.mxu0 %v708
    %1003 = vmatprep.subr.mxu0 %v701
    %1004 = vmatpush2.msra.mxu0 %v700
    %1005 = vmatprep.mubr.f32.mxu0 %v315
    %1006 = vmatmul.mubr.f32.gmra.mxu0 %v314
    %v1007 = vpop.f32.mrf.mxu0
    %v1008 = vadd.f32 %v937, %v1007
    %v1009 = vpop.f32.mrf.mxu0
    %v1010 = vadd.f32 %v939, %v1009
    %1011 = vdwg.mxu0
    %1012 = vmatprep.subr.mxu0 %v439
    %1013 = vmatpush1.msra.mxu0 %v438
    %1014 = vmatprep.subr.mxu0 %v431
    %1015 = vmatpush1.msra.mxu0 %v430
    %1016 = vmatprep.subr.mxu0 %v423
    %1017 = vmatpush1.msra.mxu0 %v422
    %1018 = vmatprep.subr.mxu0 %v415
    %1019 = vmatpush1.msra.mxu0 %v414
    %1020 = vmatprep.subr.mxu0 %v407
    %1021 = vmatpush1.msra.mxu0 %v406
    %1022 = vmatprep.subr.mxu0 %v399
    %1023 = vmatpush1.msra.mxu0 %v398
    %1024 = vmatprep.subr.mxu0 %v391
    %1025 = vmatpush1.msra.mxu0 %v390
    %1026 = vmatprep.subr.mxu0 %v383
    %1027 = vmatpush1.msra.mxu0 %v382
    %1028 = vmatprep.subr.mxu0 %v375
    %1029 = vmatpush1.msra.mxu0 %v374
    %1030 = vmatprep.subr.mxu0 %v367
    %1031 = vmatpush1.msra.mxu0 %v366
    %1032 = vmatprep.subr.mxu0 %v359
    %1033 = vmatpush1.msra.mxu0 %v358
    %1034 = vmatprep.subr.mxu0 %v351
    %1035 = vmatpush1.msra.mxu0 %v350
    %1036 = vmatprep.subr.mxu0 %v343
    %1037 = vmatpush1.msra.mxu0 %v342
    %1038 = vmatprep.subr.mxu0 %v335
    %1039 = vmatpush1.msra.mxu0 %v334
    %1040 = vmatprep.subr.mxu0 %v327
    %1041 = vmatpush1.msra.mxu0 %v326
    %1042 = vmatprep.subr.mxu0 %v319
    %1043 = vmatpush1.msra.mxu0 %v318
    %1044 = vmatprep.subr.mxu0 %v567
    %1045 = vmatpush2.msra.mxu0 %v566
    %1046 = vmatprep.subr.mxu0 %v559
    %1047 = vmatpush2.msra.mxu0 %v558
    %1048 = vmatprep.subr.mxu0 %v551
    %1049 = vmatpush2.msra.mxu0 %v550
    %1050 = vmatprep.subr.mxu0 %v543
    %1051 = vmatpush2.msra.mxu0 %v542
    %1052 = vmatprep.subr.mxu0 %v535
    %1053 = vmatpush2.msra.mxu0 %v534
    %1054 = vmatprep.subr.mxu0 %v527
    %1055 = vmatpush2.msra.mxu0 %v526
    %1056 = vmatprep.subr.mxu0 %v519
    %1057 = vmatpush2.msra.mxu0 %v518
    %1058 = vmatprep.subr.mxu0 %v511
    %1059 = vmatpush2.msra.mxu0 %v510
    %1060 = vmatprep.subr.mxu0 %v503
    %1061 = vmatpush2.msra.mxu0 %v502
    %1062 = vmatprep.subr.mxu0 %v495
    %1063 = vmatpush2.msra.mxu0 %v494
    %1064 = vmatprep.subr.mxu0 %v487
    %1065 = vmatpush2.msra.mxu0 %v486
    %1066 = vmatprep.subr.mxu0 %v479
    %1067 = vmatpush2.msra.mxu0 %v478
    %1068 = vmatprep.subr.mxu0 %v471
    %1069 = vmatpush2.msra.mxu0 %v470
    %1070 = vmatprep.subr.mxu0 %v463
    %1071 = vmatpush2.msra.mxu0 %v462
    %1072 = vmatprep.subr.mxu0 %v455
    %1073 = vmatpush2.msra.mxu0 %v454
    %1074 = vmatprep.subr.mxu0 %v447
    %1075 = vmatpush2.msra.mxu0 %v446
    %1076 = vmatprep.mubr.f32.mxu0 %v313
    %1077 = vmatmul.mubr.f32.gmra.mxu0 %v312
    %v1078 = vpop.f32.mrf.mxu0
    %v1079 = vadd.f32 %v841, %v1078
    %v1080 = vpop.f32.mrf.mxu0
    %v1081 = vadd.f32 %v845, %v1080
    %1082 = vdwg.mxu0
    %1083 = vmatprep.subr.mxu0 %v695
    %1084 = vmatpush1.msra.mxu0 %v694
    %1085 = vmatprep.subr.mxu0 %v687
    %1086 = vmatpush1.msra.mxu0 %v686
    %1087 = vmatprep.subr.mxu0 %v679
    %1088 = vmatpush1.msra.mxu0 %v678
    %1089 = vmatprep.subr.mxu0 %v671
    %1090 = vmatpush1.msra.mxu0 %v670
    %1091 = vmatprep.subr.mxu0 %v663
    %1092 = vmatpush1.msra.mxu0 %v662
    %1093 = vmatprep.subr.mxu0 %v655
    %1094 = vmatpush1.msra.mxu0 %v654
    %1095 = vmatprep.subr.mxu0 %v647
    %1096 = vmatpush1.msra.mxu0 %v646
    %1097 = vmatprep.subr.mxu0 %v639
    %1098 = vmatpush1.msra.mxu0 %v638
    %1099 = vmatprep.subr.mxu0 %v631
    %1100 = vmatpush1.msra.mxu0 %v630
    %1101 = vmatprep.subr.mxu0 %v623
    %1102 = vmatpush1.msra.mxu0 %v622
    %1103 = vmatprep.subr.mxu0 %v615
    %1104 = vmatpush1.msra.mxu0 %v614
    %1105 = vmatprep.subr.mxu0 %v607
    %1106 = vmatpush1.msra.mxu0 %v606
    %1107 = vmatprep.subr.mxu0 %v599
    %1108 = vmatpush1.msra.mxu0 %v598
    %1109 = vmatprep.subr.mxu0 %v591
    %1110 = vmatpush1.msra.mxu0 %v590
    %1111 = vmatprep.subr.mxu0 %v583
    %1112 = vmatpush1.msra.mxu0 %v582
    %1113 = vmatprep.subr.mxu0 %v575
    %1114 = vmatpush1.msra.mxu0 %v574
    %1115 = vmatprep.subr.mxu0 %v823
    %1116 = vmatpush2.msra.mxu0 %v822
    %1117 = vmatprep.subr.mxu0 %v815
    %1118 = vmatpush2.msra.mxu0 %v814
    %1119 = vmatprep.subr.mxu0 %v807
    %1120 = vmatpush2.msra.mxu0 %v806
    %1121 = vmatprep.subr.mxu0 %v799
    %1122 = vmatpush2.msra.mxu0 %v798
    %1123 = vmatprep.subr.mxu0 %v791
    %1124 = vmatpush2.msra.mxu0 %v790
    %1125 = vmatprep.subr.mxu0 %v783
    %1126 = vmatpush2.msra.mxu0 %v782
    %1127 = vmatprep.subr.mxu0 %v775
    %1128 = vmatpush2.msra.mxu0 %v774
    %1129 = vmatprep.subr.mxu0 %v767
    %1130 = vmatpush2.msra.mxu0 %v766
    %1131 = vmatprep.subr.mxu0 %v759
    %1132 = vmatpush2.msra.mxu0 %v758
    %1133 = vmatprep.subr.mxu0 %v751
    %1134 = vmatpush2.msra.mxu0 %v750
    %1135 = vmatprep.subr.mxu0 %v743
    %1136 = vmatpush2.msra.mxu0 %v742
    %1137 = vmatprep.subr.mxu0 %v735
    %1138 = vmatpush2.msra.mxu0 %v734
    %1139 = vmatprep.subr.mxu0 %v727
    %1140 = vmatpush2.msra.mxu0 %v726
    %1141 = vmatprep.subr.mxu0 %v719
    %1142 = vmatpush2.msra.mxu0 %v718
    %1143 = vmatprep.subr.mxu0 %v711
    %1144 = vmatpush2.msra.mxu0 %v710
    %1145 = vmatprep.subr.mxu0 %v703
    %1146 = vmatpush2.msra.mxu0 %v702
    %1147 = vmatprep.mubr.f32.mxu0 %v315
    %1148 = vmatmul.mubr.f32.gmra.mxu0 %v314
    %v1149 = vpop.f32.mrf.mxu0
    %v1150 = vadd.f32 %v1079, %v1149
    %v1151 = vpop.f32.mrf.mxu0
    %v1152 = vadd.f32 %v1081, %v1151
    %1153 = vdwg.mxu0
    %1154 = vmatprep.subr.mxu0 %v441
    %1155 = vmatpush1.msra.mxu0 %v440
    %1156 = vmatprep.subr.mxu0 %v433
    %1157 = vmatpush1.msra.mxu0 %v432
    %1158 = vmatprep.subr.mxu0 %v425
    %1159 = vmatpush1.msra.mxu0 %v424
    %1160 = vmatprep.subr.mxu0 %v417
    %1161 = vmatpush1.msra.mxu0 %v416
    %1162 = vmatprep.subr.mxu0 %v409
    %1163 = vmatpush1.msra.mxu0 %v408
    %1164 = vmatprep.subr.mxu0 %v401
    %1165 = vmatpush1.msra.mxu0 %v400
    %1166 = vmatprep.subr.mxu0 %v393
    %1167 = vmatpush1.msra.mxu0 %v392
    %1168 = vmatprep.subr.mxu0 %v385
    %1169 = vmatpush1.msra.mxu0 %v384
    %1170 = vmatprep.subr.mxu0 %v377
    %1171 = vmatpush1.msra.mxu0 %v376
    %1172 = vmatprep.subr.mxu0 %v369
    %1173 = vmatpush1.msra.mxu0 %v368
    %1174 = vmatprep.subr.mxu0 %v361
    %1175 = vmatpush1.msra.mxu0 %v360
    %1176 = vmatprep.subr.mxu0 %v353
    %1177 = vmatpush1.msra.mxu0 %v352
    %1178 = vmatprep.subr.mxu0 %v345
    %1179 = vmatpush1.msra.mxu0 %v344
    %1180 = vmatprep.subr.mxu0 %v337
    %1181 = vmatpush1.msra.mxu0 %v336
    %1182 = vmatprep.subr.mxu0 %v329
    %1183 = vmatpush1.msra.mxu0 %v328
    %1184 = vmatprep.subr.mxu0 %v321
    %1185 = vmatpush1.msra.mxu0 %v320
    %1186 = vmatprep.subr.mxu0 %v569
    %1187 = vmatpush2.msra.mxu0 %v568
    %1188 = vmatprep.subr.mxu0 %v561
    %1189 = vmatpush2.msra.mxu0 %v560
    %1190 = vmatprep.subr.mxu0 %v553
    %1191 = vmatpush2.msra.mxu0 %v552
    %1192 = vmatprep.subr.mxu0 %v545
    %1193 = vmatpush2.msra.mxu0 %v544
    %1194 = vmatprep.subr.mxu0 %v537
    %1195 = vmatpush2.msra.mxu0 %v536
    %1196 = vmatprep.subr.mxu0 %v529
    %1197 = vmatpush2.msra.mxu0 %v528
    %1198 = vmatprep.subr.mxu0 %v521
    %1199 = vmatpush2.msra.mxu0 %v520
    %1200 = vmatprep.subr.mxu0 %v513
    %1201 = vmatpush2.msra.mxu0 %v512
    %1202 = vmatprep.subr.mxu0 %v505
    %1203 = vmatpush2.msra.mxu0 %v504
    %1204 = vmatprep.subr.mxu0 %v497
    %1205 = vmatpush2.msra.mxu0 %v496
    %1206 = vmatprep.subr.mxu0 %v489
    %1207 = vmatpush2.msra.mxu0 %v488
    %1208 = vmatprep.subr.mxu0 %v481
    %1209 = vmatpush2.msra.mxu0 %v480
    %1210 = vmatprep.subr.mxu0 %v473
    %1211 = vmatpush2.msra.mxu0 %v472
    %1212 = vmatprep.subr.mxu0 %v465
    %1213 = vmatpush2.msra.mxu0 %v464
    %1214 = vmatprep.subr.mxu0 %v457
    %1215 = vmatpush2.msra.mxu0 %v456
    %1216 = vmatprep.subr.mxu0 %v449
    %1217 = vmatpush2.msra.mxu0 %v448
    %1218 = vmatprep.mubr.f32.mxu0 %v313
    %1219 = vmatmul.mubr.f32.gmra.mxu0 %v312
    %v1220 = vpop.f32.mrf.mxu0
    %v1221 = vadd.f32 %v849, %v1220
    %v1222 = vpop.f32.mrf.mxu0
    %v1223 = vadd.f32 %v853, %v1222
    %1224 = vdwg.mxu0
    %1225 = vmatprep.subr.mxu0 %v697
    %1226 = vmatpush1.msra.mxu0 %v696
    %1227 = vmatprep.subr.mxu0 %v689
    %1228 = vmatpush1.msra.mxu0 %v688
    %1229 = vmatprep.subr.mxu0 %v681
    %1230 = vmatpush1.msra.mxu0 %v680
    %1231 = vmatprep.subr.mxu0 %v673
    %1232 = vmatpush1.msra.mxu0 %v672
    %1233 = vmatprep.subr.mxu0 %v665
    %1234 = vmatpush1.msra.mxu0 %v664
    %1235 = vmatprep.subr.mxu0 %v657
    %1236 = vmatpush1.msra.mxu0 %v656
    %1237 = vmatprep.subr.mxu0 %v649
    %1238 = vmatpush1.msra.mxu0 %v648
    %1239 = vmatprep.subr.mxu0 %v641
    %1240 = vmatpush1.msra.mxu0 %v640
    %1241 = vmatprep.subr.mxu0 %v633
    %1242 = vmatpush1.msra.mxu0 %v632
    %1243 = vmatprep.subr.mxu0 %v625
    %1244 = vmatpush1.msra.mxu0 %v624
    %1245 = vmatprep.subr.mxu0 %v617
    %1246 = vmatpush1.msra.mxu0 %v616
    %1247 = vmatprep.subr.mxu0 %v609
    %1248 = vmatpush1.msra.mxu0 %v608
    %1249 = vmatprep.subr.mxu0 %v601
    %1250 = vmatpush1.msra.mxu0 %v600
    %1251 = vmatprep.subr.mxu0 %v593
    %1252 = vmatpush1.msra.mxu0 %v592
    %1253 = vmatprep.subr.mxu0 %v585
    %1254 = vmatpush1.msra.mxu0 %v584
    %1255 = vmatprep.subr.mxu0 %v577
    %1256 = vmatpush1.msra.mxu0 %v576
    %1257 = vmatprep.subr.mxu0 %v825
    %1258 = vmatpush2.msra.mxu0 %v824
    %1259 = vmatprep.subr.mxu0 %v817
    %1260 = vmatpush2.msra.mxu0 %v816
    %1261 = vmatprep.subr.mxu0 %v809
    %1262 = vmatpush2.msra.mxu0 %v808
    %1263 = vmatprep.subr.mxu0 %v801
    %1264 = vmatpush2.msra.mxu0 %v800
    %1265 = vmatprep.subr.mxu0 %v793
    %1266 = vmatpush2.msra.mxu0 %v792
    %1267 = vmatprep.subr.mxu0 %v785
    %1268 = vmatpush2.msra.mxu0 %v784
    %1269 = vmatprep.subr.mxu0 %v777
    %1270 = vmatpush2.msra.mxu0 %v776
    %1271 = vmatprep.subr.mxu0 %v769
    %1272 = vmatpush2.msra.mxu0 %v768
    %1273 = vmatprep.subr.mxu0 %v761
    %1274 = vmatpush2.msra.mxu0 %v760
    %1275 = vmatprep.subr.mxu0 %v753
    %1276 = vmatpush2.msra.mxu0 %v752
    %1277 = vmatprep.subr.mxu0 %v745
    %1278 = vmatpush2.msra.mxu0 %v744
    %1279 = vmatprep.subr.mxu0 %v737
    %1280 = vmatpush2.msra.mxu0 %v736
    %1281 = vmatprep.subr.mxu0 %v729
    %1282 = vmatpush2.msra.mxu0 %v728
    %1283 = vmatprep.subr.mxu0 %v721
    %1284 = vmatpush2.msra.mxu0 %v720
    %1285 = vmatprep.subr.mxu0 %v713
    %1286 = vmatpush2.msra.mxu0 %v712
    %1287 = vmatprep.subr.mxu0 %v705
    %1288 = vmatpush2.msra.mxu0 %v704
    %1289 = vmatprep.mubr.f32.mxu0 %v315
    %1290 = vmatmul.mubr.f32.gmra.mxu0 %v314
    %v1291 = vpop.f32.mrf.mxu0
    %v1292 = vadd.f32 %v1221, %v1291
    %v1293 = vpop.f32.mrf.mxu0
    %v1294 = vadd.f32 %v1223, %v1293
    %1295 = vdwg.mxu0
    %1296 = vmatprep.subr.mxu0 %v443
    %1297 = vmatpush1.msra.mxu0 %v442
    %1298 = vmatprep.subr.mxu0 %v435
    %1299 = vmatpush1.msra.mxu0 %v434
    %1300 = vmatprep.subr.mxu0 %v427
    %1301 = vmatpush1.msra.mxu0 %v426
    %1302 = vmatprep.subr.mxu0 %v419
    %1303 = vmatpush1.msra.mxu0 %v418
    %1304 = vmatprep.subr.mxu0 %v411
    %1305 = vmatpush1.msra.mxu0 %v410
    %1306 = vmatprep.subr.mxu0 %v403
    %1307 = vmatpush1.msra.mxu0 %v402
    %1308 = vmatprep.subr.mxu0 %v395
    %1309 = vmatpush1.msra.mxu0 %v394
    %1310 = vmatprep.subr.mxu0 %v387
    %1311 = vmatpush1.msra.mxu0 %v386
    %1312 = vmatprep.subr.mxu0 %v379
    %1313 = vmatpush1.msra.mxu0 %v378
    %1314 = vmatprep.subr.mxu0 %v371
    %1315 = vmatpush1.msra.mxu0 %v370
    %1316 = vmatprep.subr.mxu0 %v363
    %1317 = vmatpush1.msra.mxu0 %v362
    %1318 = vmatprep.subr.mxu0 %v355
    %1319 = vmatpush1.msra.mxu0 %v354
    %1320 = vmatprep.subr.mxu0 %v347
    %1321 = vmatpush1.msra.mxu0 %v346
    %1322 = vmatprep.subr.mxu0 %v339
    %1323 = vmatpush1.msra.mxu0 %v338
    %1324 = vmatprep.subr.mxu0 %v331
    %1325 = vmatpush1.msra.mxu0 %v330
    %1326 = vmatprep.subr.mxu0 %v323
    %1327 = vmatpush1.msra.mxu0 %v322
    %1328 = vmatprep.subr.mxu0 %v571
    %1329 = vmatpush2.msra.mxu0 %v570
    %1330 = vmatprep.subr.mxu0 %v563
    %1331 = vmatpush2.msra.mxu0 %v562
    %1332 = vmatprep.subr.mxu0 %v555
    %1333 = vmatpush2.msra.mxu0 %v554
    %1334 = vmatprep.subr.mxu0 %v547
    %1335 = vmatpush2.msra.mxu0 %v546
    %1336 = vmatprep.subr.mxu0 %v539
    %1337 = vmatpush2.msra.mxu0 %v538
    %1338 = vmatprep.subr.mxu0 %v531
    %1339 = vmatpush2.msra.mxu0 %v530
    %1340 = vmatprep.subr.mxu0 %v523
    %1341 = vmatpush2.msra.mxu0 %v522
    %1342 = vmatprep.subr.mxu0 %v515
    %1343 = vmatpush2.msra.mxu0 %v514
    %1344 = vmatprep.subr.mxu0 %v507
    %1345 = vmatpush2.msra.mxu0 %v506
    %1346 = vmatprep.subr.mxu0 %v499
    %1347 = vmatpush2.msra.mxu0 %v498
    %1348 = vmatprep.subr.mxu0 %v491
    %1349 = vmatpush2.msra.mxu0 %v490
    %1350 = vmatprep.subr.mxu0 %v483
    %1351 = vmatpush2.msra.mxu0 %v482
    %1352 = vmatprep.subr.mxu0 %v475
    %1353 = vmatpush2.msra.mxu0 %v474
    %1354 = vmatprep.subr.mxu0 %v467
    %1355 = vmatpush2.msra.mxu0 %v466
    %1356 = vmatprep.subr.mxu0 %v459
    %1357 = vmatpush2.msra.mxu0 %v458
    %1358 = vmatprep.subr.mxu0 %v451
    %1359 = vmatpush2.msra.mxu0 %v450
    %1360 = vmatprep.mubr.f32.mxu0 %v313
    %1361 = vmatmul.mubr.f32.gmra.mxu0 %v312
    %v1362 = vpop.f32.mrf.mxu0
    %v1363 = vadd.f32 %v857, %v1362
    %v1364 = vpop.f32.mrf.mxu0
    %v1365 = vadd.f32 %v861, %v1364
    %1366 = vdwg.mxu0
    %1367 = vmatprep.subr.mxu0 %v699
    %1368 = vmatpush1.msra.mxu0 %v698
    %1369 = vmatprep.subr.mxu0 %v691
    %1370 = vmatpush1.msra.mxu0 %v690
    %1371 = vmatprep.subr.mxu0 %v683
    %1372 = vmatpush1.msra.mxu0 %v682
    %1373 = vmatprep.subr.mxu0 %v675
    %1374 = vmatpush1.msra.mxu0 %v674
    %1375 = vmatprep.subr.mxu0 %v667
    %1376 = vmatpush1.msra.mxu0 %v666
    %1377 = vmatprep.subr.mxu0 %v659
    %1378 = vmatpush1.msra.mxu0 %v658
    %1379 = vmatprep.subr.mxu0 %v651
    %1380 = vmatpush1.msra.mxu0 %v650
    %1381 = vmatprep.subr.mxu0 %v643
    %1382 = vmatpush1.msra.mxu0 %v642
    %1383 = vmatprep.subr.mxu0 %v635
    %1384 = vmatpush1.msra.mxu0 %v634
    %1385 = vmatprep.subr.mxu0 %v627
    %1386 = vmatpush1.msra.mxu0 %v626
    %1387 = vmatprep.subr.mxu0 %v619
    %1388 = vmatpush1.msra.mxu0 %v618
    %1389 = vmatprep.subr.mxu0 %v611
    %1390 = vmatpush1.msra.mxu0 %v610
    %1391 = vmatprep.subr.mxu0 %v603
    %1392 = vmatpush1.msra.mxu0 %v602
    %1393 = vmatprep.subr.mxu0 %v595
    %1394 = vmatpush1.msra.mxu0 %v594
    %1395 = vmatprep.subr.mxu0 %v587
    %1396 = vmatpush1.msra.mxu0 %v586
    %1397 = vmatprep.subr.mxu0 %v579
    %1398 = vmatpush1.msra.mxu0 %v578
    %1399 = vmatprep.subr.mxu0 %v827
    %1400 = vmatpush2.msra.mxu0 %v826
    %1401 = vmatprep.subr.mxu0 %v819
    %1402 = vmatpush2.msra.mxu0 %v818
    %1403 = vmatprep.subr.mxu0 %v811
    %1404 = vmatpush2.msra.mxu0 %v810
    %1405 = vmatprep.subr.mxu0 %v803
    %1406 = vmatpush2.msra.mxu0 %v802
    %1407 = vmatprep.subr.mxu0 %v795
    %1408 = vmatpush2.msra.mxu0 %v794
    %1409 = vmatprep.subr.mxu0 %v787
    %1410 = vmatpush2.msra.mxu0 %v786
    %1411 = vmatprep.subr.mxu0 %v779
    %1412 = vmatpush2.msra.mxu0 %v778
    %1413 = vmatprep.subr.mxu0 %v771
    %1414 = vmatpush2.msra.mxu0 %v770
    %1415 = vmatprep.subr.mxu0 %v763
    %1416 = vmatpush2.msra.mxu0 %v762
    %1417 = vmatprep.subr.mxu0 %v755
    %1418 = vmatpush2.msra.mxu0 %v754
    %1419 = vmatprep.subr.mxu0 %v747
    %1420 = vmatpush2.msra.mxu0 %v746
    %1421 = vmatprep.subr.mxu0 %v739
    %1422 = vmatpush2.msra.mxu0 %v738
    %1423 = vmatprep.subr.mxu0 %v731
    %1424 = vmatpush2.msra.mxu0 %v730
    %1425 = vmatprep.subr.mxu0 %v723
    %1426 = vmatpush2.msra.mxu0 %v722
    %1427 = vmatprep.subr.mxu0 %v715
    %1428 = vmatpush2.msra.mxu0 %v714
    %1429 = vmatprep.subr.mxu0 %v707
    %1430 = vmatpush2.msra.mxu0 %v706
    %1431 = vmatprep.mubr.f32.mxu0 %v315
    %1432 = vmatmul.mubr.f32.gmra.mxu0 %v314
    %v1433 = vpop.f32.mrf.mxu0
    %v1434 = vadd.f32 %v1363, %v1433
    %v1435 = vpop.f32.mrf.mxu0
    %v1436 = vadd.f32 %v1365, %v1435
    %1437 = vdwg.mxu0
    %v1438 = vmax.f32 %v1008, 0.0
    %v1439 = vmax.f32 %v1010, 0.0
    %v1440 = vmax.f32 %v1150, 0.0
    %v1441 = vmax.f32 %v1152, 0.0
    %v1442 = vmax.f32 %v1292, 0.0
    %v1443 = vmax.f32 %v1294, 0.0
    %v1444 = vmax.f32 %v1434, 0.0
    %v1445 = vmax.f32 %v1436, 0.0
    %v1446 = vpack.c.bf16 %v1438, %v1438
    %v1447 = vpack.c.bf16 %v1439, %v1439
    %v1448 = vpack.c.bf16 %v1440, %v1440
    %v1449 = vpack.c.bf16 %v1441, %v1441
    %v1450 = vpack.c.bf16 %v1442, %v1442
    %v1451 = vpack.c.bf16 %v1443, %v1443
    %v1452 = vpack.c.bf16 %v1444, %v1444
    %v1453 = vpack.c.bf16 %v1445, %v1445
    %v1462 = vcombine.low %v1446, %v1447
    %v1463 = vcombine.low %v1448, %v1449
    %v1464 = vcombine.low %v1450, %v1451
    %v1465 = vcombine.low %v1452, %v1453
    %v1467 = vunpack.c.l.s4 1966171168
    %v1468 = vunpack.c.0.s8 %v1467
    %v1469 = vlaneseq
    %v1470 = vshrl.u32 %v1469, 7
    %v1471 = vsub.s32 %v1468, %v1470
    %v1472 = vrot.slane %v1462, %v1471
    %v1474 = vunpack.c.l.s4 1966171168
    %v1475 = vunpack.c.0.s8 %v1474
    %v1476 = vlaneseq
    %v1477 = vshrl.u32 %v1476, 7
    %v1478 = vsub.s32 %v1475, %v1477
    %v1479 = vrot.slane %v1463, %v1478
    %v1481 = vunpack.c.l.s4 1966171168
    %v1482 = vunpack.c.0.s8 %v1481
    %v1483 = vlaneseq
    %v1484 = vshrl.u32 %v1483, 7
    %v1485 = vsub.s32 %v1482, %v1484
    %v1486 = vrot.slane %v1464, %v1485
    %v1488 = vunpack.c.l.s4 1966171168
    %v1489 = vunpack.c.0.s8 %v1488
    %v1490 = vlaneseq
    %v1491 = vshrl.u32 %v1490, 7
    %v1492 = vsub.s32 %v1489, %v1491
    %v1493 = vrot.slane %v1465, %v1492
    %v1494 = vcombine.low %v1472, %v1479
    %v1495 = vcombine.low %v1486, %v1493
    %v1497 = vunpack.c.l.s4 1966171168
    %v1498 = vunpack.c.0.s8 %v1497
    %v1499 = vlaneseq
    %v1500 = vshrl.u32 %v1499, 7
    %v1501 = vsub.s32 %v1498, %v1500
    %v1502 = vrot.slane %v1494, %v1501
    %v1504 = vunpack.c.l.s4 1966171168
    %v1505 = vunpack.c.0.s8 %v1504
    %v1506 = vlaneseq
    %v1507 = vshrl.u32 %v1506, 7
    %v1508 = vsub.s32 %v1505, %v1507
    %v1509 = vrot.slane %v1495, %v1508
    %v1510 = vcombine.low %v1502, %v1509
    %1512 = vst [vmem:[#allocation11] sm:$0xff] %v1510
    // Predicated region
    $region42: #{tpu_custom_call.1} parent=1 // pred_check
      _
    $region43: #{tpu_custom_call.1} parent=1 // pred_check_branch
      %1514 = sbr.rel (0) target = $region45
    $region44: #{tpu_custom_call.1} parent=1 // pred_region
      %s1516 = ssub.s32 128, 128
      %1517 = vsyncadd [#allocation4], %s1516
      %s1519 = sshll.u32 [#allocation11], 4
      %s1520 = int_to_ptr.vmem [resolvable:$true] %s1519
      %1522 = dma.vmem_to_hbm [thread:$0]  %s1520, 128, %s5, [#allocation4]
    $region45: #{tpu_custom_call.1} parent=1 // pred_fallthru
      _
    // Predicated region
    $region46: #{tpu_custom_call.1} parent=1 // pred_check
      _
    $region47: #{tpu_custom_call.1} parent=1 // pred_check_branch
      %1524 = sbr.rel (0) target = $region49
    $region48: #{tpu_custom_call.1} parent=1 // pred_region
      %1525 = dma.done [#allocation4], 128
    $region49: #{tpu_custom_call.1} parent=1 // pred_fallthru
      _
    %1526 = vsyncpa [#allocation3], 1
    %1527 = vsyncpa [#allocation6], 1
    %1528 = vsyncpa [#allocation9], 1
    %1529 = vsyncpa [#allocation4], 1

</llo_original>
